<compile_context>
chip_gen: v7x
topology: tpu7x:2x2x1
jax: 0.10.0
libtpu: 0.0.40
codegen_flags: <defaults>
</compile_context>

<pallas_src>
import functools

import jax
import jax.numpy as jnp
from jax.experimental import pallas as pl
from jax.experimental.pallas import tpu as pltpu


# ----------------------------------------------------------------------------
# Small in-kernel helpers (values only, layout-friendly ops).
# ----------------------------------------------------------------------------
def _even_rows(v, start, count):
    """Rows start, start+2, ..., start+2*(count-1) of a 3-D value, using only a
    contiguous leading-dim slice plus a leading-dim concat/reshape/index (no
    strided sublane accesses)."""
    block = v[start:start + 2 * count - 1]
    pad = jnp.zeros((1,) + block.shape[1:], block.dtype)
    block = jnp.concatenate([block, pad], axis=0)            # 2*count rows
    return block.reshape(count, 2, block.shape[1], block.shape[2])[:, 0]


def _shift_cols(x):
    """Column-shifted copies of x: left[..., c, :] = x[..., c-1, :] (zero at
    c==0) and right[..., c, :] = x[..., c+1, :] (zero at c==W-1).  Realizes the
    depthwise width zero-padding without a padded scratch or offset-1 stores."""
    z = jnp.zeros(x.shape[:1] + (1,) + x.shape[2:], x.dtype)
    left = jnp.concatenate([z, x[:, :-1, :]], axis=1)
    right = jnp.concatenate([x[:, 1:, :], z], axis=1)
    return left, right


# ----------------------------------------------------------------------------
# Fused kernel: one (batch, row-block) tile of the whole InvertedResidual.
# ----------------------------------------------------------------------------
def _fused_block_kernel(*refs, stride, use_res, hidden_dtype):
    if stride == 1:
        (x_top_ref, x_cur_ref, x_bot_ref,
         w1_ref, b1_ref, w2_ref, b2_ref, w3_ref, b3_ref, o_ref) = refs
    else:
        (x_top_ref, x_cur_ref,
         w1_ref, b1_ref, w2_ref, b2_ref, w3_ref, b3_ref, o_ref) = refs
        x_bot_ref = None

    i = pl.program_id(1)
    last = pl.num_programs(1) - 1

    # ---- assemble the input row window (leading-dim concat, no relayout) ----
    x_cur = x_cur_ref[0]                                     # (ths, W, Cin)
    parts = [x_top_ref[0], x_cur]
    if x_bot_ref is not None:                                # stride == 1 only
        parts.append(x_bot_ref[0])
    xw = jnp.concatenate(parts, axis=0)                      # (th_in, W, Cin)

    th_in, w_img, cin = xw.shape
    hidden = w1_ref.shape[1]
    oup = w3_ref.shape[1]
    th = (th_in - 3) // stride + 1                           # output rows / block
    wo = w_img if stride == 1 else (w_img - 1) // 2 + 1      # output cols / block

    # ---- 1x1 expand conv + folded BN + ReLU (MXU, f32 accumulation) ----
    h = jnp.dot(xw.reshape(th_in * w_img, cin).astype(w1_ref.dtype), w1_ref[...],
                preferred_element_type=jnp.float32)
    h = jnp.maximum(h + b1_ref[...], 0.0).reshape(th_in, w_img, hidden)

    # ---- depthwise zero padding is in *hidden* space (PyTorch pads the
    #      expanded activation): border halo rows must be exactly zero. ----
    zero_row = jnp.zeros((1, w_img, hidden), jnp.float32)
    h_top = jnp.where(i > 0, h[0:1], zero_row)
    if stride == 1:
        h_bot = jnp.where(i < last, h[th_in - 1:th_in], zero_row)
        h = jnp.concatenate([h_top, h[1:th_in - 1], h_bot], axis=0)
    else:
        h = jnp.concatenate([h_top, h[1:]], axis=0)
    h = h.astype(hidden_dtype)        # optionally bf16: halves the 9x re-reads

    # ---- 3x3 depthwise conv + folded BN + ReLU (VPU, f32 accumulation) ----
    w2 = w2_ref[...]                                         # (9, hidden) f32
    w2t = [w2[k].reshape(1, 1, hidden) for k in range(9)]    # hoisted taps
    b2 = b2_ref[...].reshape(1, 1, hidden)
    acc = jnp.zeros((th, w_img, hidden), jnp.float32)
    if stride == 1:
        left, right = _shift_cols(h)                         # built once/window
        taps = (left, h, right)                              # dj = 0, 1, 2
        for di in range(3):
            for dj in range(3):
                acc = acc + taps[dj][di:di + th] * w2t[di * 3 + dj]
    else:
        for di in range(3):
            base = _even_rows(h, di, th)                     # rows di, di+2, ...
            left, right = _shift_cols(base)
            taps = (left, base, right)
            for dj in range(3):
                acc = acc + taps[dj] * w2t[di * 3 + dj]
    d = jnp.maximum(acc + b2, 0.0)                           # (th, W, hidden) f32
    if stride == 2:
        d = d[:, ::2, :]                # in-kernel column subsample (half FLOPs
                                        # / store bytes of the project stage)

    # ---- 1x1 project conv + folded BN (+ fused residual) ----
    y = jnp.dot(d.reshape(th * wo, hidden).astype(w3_ref.dtype), w3_ref[...],
                preferred_element_type=jnp.float32)
    y = y + b3_ref[...]
    if use_res:
        # stride==1 and inp==oup: residual reuses the VMEM-resident f32 window.
        y = y + x_cur.reshape(th * wo, cin).astype(jnp.float32)
    o_ref[...] = y.reshape(1, th, wo, oup)


# ----------------------------------------------------------------------------
# Row-block sizing against a per-step VMEM budget (v7x-safe by default).
# ----------------------------------------------------------------------------
def _vmem_bytes_per_step(th, w_img, cin, hidden, oup, stride, hidden_itemsize):
    ths = th * stride
    th_in = (th - 1) * stride + 3
    wo = w_img if stride == 1 else (w_img - 1) // 2 + 1
    b = 2 * (ths + 2) * w_img * cin * 4                 # double-buffered input
    b += 3 * th_in * w_img * hidden * hidden_itemsize   # hidden win + 2 shifted
    b += 2 * th * w_img * hidden * 4                    # depthwise acc + d
    b += 2 * th * wo * oup * 4                          # double-buffered output
    return b


def _pick_row_block(ho, w_img, cin, hidden, oup, stride, target, budget,
                    hidden_itemsize):
    target = max(1, min(target, ho))
    best = 1
    for th in range(1, target + 1):
        if ho % th:
            continue
        if _vmem_bytes_per_step(th, w_img, cin, hidden, oup, stride,
                                hidden_itemsize) <= budget:
            best = th
    return best


# ----------------------------------------------------------------------------
# Full InvertedResidual forward (NCHW in / NCHW out, like PyTorch).
# ----------------------------------------------------------------------------
def inverted_residual(x_nchw, params, *, inp, oup, stride, row_block=32,
                      compute_dtype=jnp.bfloat16, hidden_dtype=jnp.float32,
                      vmem_budget_bytes=12 * 2**20):
    assert stride in (1, 2)
    use_res = (stride == 1) and (inp == oup)

    # NHWC with channels on the 128-lane axis.  The input stays f32 in HBM so
    # the fused residual add is exact; MXU operands are cast to bf16 in-kernel.
    x = jnp.transpose(x_nchw, (0, 2, 3, 1)).astype(jnp.float32)
    n, h_img, w_img, cin = x.shape
    assert cin == inp
    hidden = params["w1"].shape[1]
    assert params["w3"].shape[1] == oup
    if stride == 2:
        # TODO(synk): odd image heights with stride 2 need a bottom halo row.
        assert h_img % 2 == 0, "stride-2 path assumes an even image height"
    ho = (h_img + 2 - 3) // stride + 1
    wo = (w_img + 2 - 3) // stride + 1

    th = _pick_row_block(ho, w_img, cin, hidden, oup, stride, row_block,
                         vmem_budget_bytes, jnp.dtype(hidden_dtype).itemsize)
    nblk = ho // th
    ths = th * stride                     # fresh input rows per block
    th_in = (th - 1) * stride + 3         # input rows per block incl. halo

    # Fold eval-mode BN scale into the conv weights; the kernel only adds bias.
    f32 = jnp.float32
    w1f = (params["w1"] * params["s1"][None, :]).astype(compute_dtype)
    w3f = (params["w3"] * params["s3"][None, :]).astype(compute_dtype)
    w2f = (params["w2"] * params["s2"][None, :]).astype(f32)  # depthwise stays f32
    b1 = params["b1"].reshape(1, hidden).astype(f32)
    b2 = params["b2"].reshape(1, hidden).astype(f32)
    b3 = params["b3"].reshape(1, oup).astype(f32)

    # Halo rows: the same input array is passed 2-3x; two 1-row BlockSpecs fetch
    # the previous/next image row (clamped at the border; the kernel zeroes the
    # corresponding *hidden* rows, which is the PyTorch padding semantics).
    top_spec = pl.BlockSpec(
        (1, 1, w_img, cin), lambda b, i: (b, jnp.maximum(i * ths - 1, 0), 0, 0))
    cur_spec = pl.BlockSpec((1, ths, w_img, cin), lambda b, i: (b, i, 0, 0))
    in_specs = [top_spec, cur_spec]
    args = [x, x]
    if stride == 1:
        bot_spec = pl.BlockSpec(
            (1, 1, w_img, cin),
            lambda b, i: (b, jnp.minimum((i + 1) * ths, h_img - 1), 0, 0))
        in_specs.append(bot_spec)
        args.append(x)

    weights = [w1f, b1, w2f, b2, w3f, b3]
    # Constant index maps keep the small per-channel operands VMEM-resident
    # across grid steps (no re-DMA after the first fetch).
    in_specs += [pl.BlockSpec(a.shape, lambda b, i: (0, 0)) for a in weights]
    args += weights

    # 4-D output block whose last two dims equal the full array dims -> no
    # (8,128) divisibility hazard for odd spatial sizes / channel counts.
    out_spec = pl.BlockSpec((1, th, wo, oup), lambda b, i: (b, i, 0, 0))

    flops = (2 * n * nblk * th_in * w_img * cin * hidden
             + 2 * n * ho * w_img * 9 * hidden
             + 2 * n * ho * wo * hidden * oup)
    bytes_accessed = (n * (h_img + 2 * nblk) * w_img * cin * 4
                      + sum(a.size * a.dtype.itemsize for a in weights)
                      + n * ho * wo * oup * 4)

    out = pl.pallas_call(
        functools.partial(_fused_block_kernel, stride=stride, use_res=use_res,
                          hidden_dtype=hidden_dtype),
        grid=(n, nblk),
        in_specs=in_specs,
        out_specs=out_spec,
        out_shape=jax.ShapeDtypeStruct((n, ho, wo, oup), jnp.float32),
        compiler_params=pltpu.CompilerParams(
            dimension_semantics=("parallel", "parallel")),
        cost_estimate=pl.CostEstimate(flops=int(flops), transcendentals=0,
                                      bytes_accessed=int(bytes_accessed)),
    )(*args)

    return jnp.transpose(out, (0, 3, 1, 2))      # NHWC -> NCHW


# ----------------------------------------------------------------------------
# Deterministic parameter construction (eval-mode BN as scale/bias).
# ----------------------------------------------------------------------------
def make_params(key, inp, oup, expand_ratio):
    hidden = inp * expand_ratio
    keys = jax.random.split(key, 15)
    eps = 1e-5

    def bn_fold(kg, kb, km, kv, c):
        gamma = 1.0 + 0.1 * jax.random.normal(kg, (c,), jnp.float32)
        beta = 0.1 * jax.random.normal(kb, (c,), jnp.float32)
        mean = 0.1 * jax.random.normal(km, (c,), jnp.float32)
        var = 0.5 + jax.random.uniform(kv, (c,), jnp.float32)
        scale = gamma / jnp.sqrt(var + eps)
        bias = beta - mean * scale
        return scale, bias

    # 1x1 expand conv: PyTorch (hidden, inp, 1, 1) -> matmul (inp, hidden)
    w1 = 0.1 * jax.random.normal(keys[0], (inp, hidden), jnp.float32)
    s1, b1 = bn_fold(keys[1], keys[2], keys[3], keys[4], hidden)
    # 3x3 depthwise conv: PyTorch (hidden, 1, 3, 3) -> (9, hidden)
    w2 = 0.1 * jax.random.normal(keys[5], (9, hidden), jnp.float32)
    s2, b2 = bn_fold(keys[6], keys[7], keys[8], keys[9], hidden)
    # 1x1 project conv: PyTorch (oup, hidden, 1, 1) -> (hidden, oup)
    w3 = 0.1 * jax.random.normal(keys[10], (hidden, oup), jnp.float32)
    s3, b3 = bn_fold(keys[11], keys[12], keys[13], keys[14], oup)
    return dict(w1=w1, s1=s1, b1=b1, w2=w2, s2=s2, b2=b2, w3=w3, s3=s3, b3=b3)


# ----------------------------------------------------------------------------
# Pure-JAX reference (lax convs at HIGHEST precision, unfolded BN).
# ----------------------------------------------------------------------------
def reference_forward(x_nchw, p, *, inp, oup, stride, expand_ratio):
    hidden = inp * expand_ratio
    use_res = (stride == 1) and (inp == oup)
    dn = ("NHWC", "HWIO", "NHWC")
    prec = jax.lax.Precision.HIGHEST
    x = jnp.transpose(x_nchw, (0, 2, 3, 1)).astype(jnp.float32)

    h = jax.lax.conv_general_dilated(x, p["w1"][None, None], (1, 1), "VALID",
                                     dimension_numbers=dn, precision=prec)
    h = jnp.maximum(h * p["s1"] + p["b1"], 0.0)

    wdw = p["w2"].reshape(3, 3, hidden)[:, :, None, :]       # HWIO, I=1
    h = jax.lax.conv_general_dilated(h, wdw, (stride, stride), ((1, 1), (1, 1)),
                                     dimension_numbers=dn,
                                     feature_group_count=hidden, precision=prec)
    h = jnp.maximum(h * p["s2"] + p["b2"], 0.0)

    h = jax.lax.conv_general_dilated(h, p["w3"][None, None], (1, 1), "VALID",
                                     dimension_numbers=dn, precision=prec)
    h = h * p["s3"] + p["b3"]
    if use_res:
        h = h + x
    return jnp.transpose(h, (0, 3, 1, 2))


if __name__ == "__main__":
    key = jax.random.PRNGKey(0)
    keys = jax.random.split(key, 8)

    def run_case(inp, oup, stride, expand, *, row_block, compute_dtype,
                 hidden_dtype, tol, kx, kp):
        N, H, W = 2, 16, 16
        x = jax.random.normal(kx, (N, inp, H, W), jnp.float32)  # NCHW like PyTorch
        p = make_params(kp, inp, oup, expand)
        out = inverted_residual(x, p, inp=inp, oup=oup, stride=stride,
                                row_block=row_block, compute_dtype=compute_dtype,
                                hidden_dtype=hidden_dtype)
        out = jax.block_until_ready(out)
        ref = reference_forward(x, p, inp=inp, oup=oup, stride=stride,
                                expand_ratio=expand)
        assert out.shape == ref.shape
        err = float(jnp.max(jnp.abs(out - ref)))
        assert err < tol, (
            f"mismatch (stride={stride}, oup={oup}, compute={compute_dtype}, "
            f"hidden={hidden_dtype}): {err}")

    # Tolerances: 2e-2 for the f32-operand path (covers MXU default-precision
    # rounding on real hardware; ~1e-6 in interpret mode), 6e-2 for bf16 MXU
    # operands / bf16 hidden storage (f32 accumulation + f32 epilogue).
    # 1) stride=1, inp==oup -> fused residual path, bf16 MXU operands (default).
    run_case(4, 4, 1, 2, row_block=8, compute_dtype=jnp.bfloat16,
             hidden_dtype=jnp.float32, tol=6e-2, kx=keys[0], kp=keys[1])
    # 2) stride=1, inp!=oup, f32 operands, 4 row-blocks (previously failing case).
    run_case(4, 8, 1, 2, row_block=4, compute_dtype=jnp.float32,
             hidden_dtype=jnp.float32, tol=2e-2, kx=keys[2], kp=keys[3])
    # 3) stride=2 downsampling block (in-kernel row + column subsampling).
    run_case(4, 8, 2, 3, row_block=4, compute_dtype=jnp.bfloat16,
             hidden_dtype=jnp.float32, tol=6e-2, kx=keys[4], kp=keys[5])
    # 4) bf16 hidden-activation storage for the depthwise hot loop (v6e/v7x).
    run_case(4, 4, 1, 2, row_block=8, compute_dtype=jnp.bfloat16,
             hidden_dtype=jnp.bfloat16, tol=6e-2, kx=keys[6], kp=keys[7])

    print("KERNEL_OK")
</pallas_src>

<mosaic_0001>
module attributes {stable_mosaic.version = 11 : i64} {
  func.func @_fused_block_kernel(%arg0: i32, %arg1: i32, %arg2: memref<1x1x16x4xf32, #tpu.memory_space<vmem>>, %arg3: memref<1x8x16x4xf32, #tpu.memory_space<vmem>>, %arg4: memref<1x1x16x4xf32, #tpu.memory_space<vmem>>, %arg5: memref<4x8xbf16, #tpu.memory_space<vmem>>, %arg6: memref<1x8xf32, #tpu.memory_space<vmem>>, %arg7: memref<9x8xf32, #tpu.memory_space<vmem>>, %arg8: memref<1x8xf32, #tpu.memory_space<vmem>>, %arg9: memref<8x4xbf16, #tpu.memory_space<vmem>>, %arg10: memref<1x4xf32, #tpu.memory_space<vmem>>, %arg11: memref<1x8x16x4xf32, #tpu.memory_space<vmem>>) attributes {dimension_semantics = [#tpu.dimension_semantics<parallel>, #tpu.dimension_semantics<parallel>], iteration_bounds = array<i64: 2, 2>, scalar_prefetch = 0 : i64, scratch_operands = 0 : i64, tpu.core_type = #tpu.core_type<tc>, window_params = [{transform_indices = @transform_0, window_bounds = array<i64: 1, 1, 16, 4>}, {transform_indices = @transform_1, window_bounds = array<i64: 1, 8, 16, 4>}, {transform_indices = @transform_2, window_bounds = array<i64: 1, 1, 16, 4>}, {pipeline_mode = #tpu.pipeline_mode<synchronous>, transform_indices = @transform_3, window_bounds = array<i64: 4, 8>}, {pipeline_mode = #tpu.pipeline_mode<synchronous>, transform_indices = @transform_4, window_bounds = array<i64: 1, 8>}, {pipeline_mode = #tpu.pipeline_mode<synchronous>, transform_indices = @transform_5, window_bounds = array<i64: 9, 8>}, {pipeline_mode = #tpu.pipeline_mode<synchronous>, transform_indices = @transform_6, window_bounds = array<i64: 1, 8>}, {pipeline_mode = #tpu.pipeline_mode<synchronous>, transform_indices = @transform_7, window_bounds = array<i64: 8, 4>}, {pipeline_mode = #tpu.pipeline_mode<synchronous>, transform_indices = @transform_8, window_bounds = array<i64: 1, 4>}, {transform_indices = @transform_9, window_bounds = array<i64: 1, 8, 16, 4>}]} {
    %c0 = arith.constant 0 : index
    %c0_0 = arith.constant 0 : index
    %c0_1 = arith.constant 0 : index
    %c0_2 = arith.constant 0 : index
    %0 = vector.load %arg3[%c0, %c0_0, %c0_1, %c0_2] : memref<1x8x16x4xf32, #tpu.memory_space<vmem>>, vector<1x8x16x4xf32>
    %1 = vector.shape_cast %0 : vector<1x8x16x4xf32> to vector<8x16x4xf32>
    %c0_3 = arith.constant 0 : index
    %c0_4 = arith.constant 0 : index
    %c0_5 = arith.constant 0 : index
    %c0_6 = arith.constant 0 : index
    %2 = vector.load %arg2[%c0_3, %c0_4, %c0_5, %c0_6] : memref<1x1x16x4xf32, #tpu.memory_space<vmem>>, vector<1x1x16x4xf32>
    %3 = vector.shape_cast %2 : vector<1x1x16x4xf32> to vector<1x16x4xf32>
    %c0_7 = arith.constant 0 : index
    %c0_8 = arith.constant 0 : index
    %c0_9 = arith.constant 0 : index
    %c0_10 = arith.constant 0 : index
    %4 = vector.load %arg4[%c0_7, %c0_8, %c0_9, %c0_10] : memref<1x1x16x4xf32, #tpu.memory_space<vmem>>, vector<1x1x16x4xf32>
    %5 = vector.shape_cast %4 : vector<1x1x16x4xf32> to vector<1x16x4xf32>
    %6 = tpu.concatenate %3, %1, %5 in 0 : vector<1x16x4xf32>, vector<8x16x4xf32>, vector<1x16x4xf32> -> vector<10x16x4xf32>
    %7 = vector.shape_cast %6 : vector<10x16x4xf32> to vector<160x4xf32>
    %8 = arith.truncf %7 : vector<160x4xf32> to vector<160x4xbf16>
    %c0_11 = arith.constant 0 : index
    %c0_12 = arith.constant 0 : index
    %9 = vector.load %arg5[%c0_11, %c0_12] : memref<4x8xbf16, #tpu.memory_space<vmem>>, vector<4x8xbf16>
    %cst = arith.constant dense<0.000000e+00> : vector<160x8xf32>
    %10 = tpu.matmul %8, %9, %cst {dimension_numbers = #tpu.dot_dimension_numbers<[1], [0], [0], [1], [0, 0, 1, 1], [], []>} : vector<160x4xbf16>, vector<4x8xbf16>, vector<160x8xf32> -> vector<160x8xf32>
    %c0_13 = arith.constant 0 : index
    %c0_14 = arith.constant 0 : index
    %11 = vector.load %arg6[%c0_13, %c0_14] : memref<1x8xf32, #tpu.memory_space<vmem>>, vector<1x8xf32>
    %12 = vector.broadcast %11 : vector<1x8xf32> to vector<160x8xf32>
    %13 = arith.addf %10, %12 : vector<160x8xf32>
    %cst_15 = arith.constant 0.000000e+00 : f32
    %14 = vector.broadcast %cst_15 : f32 to vector<160x8xf32>
    %15 = arith.maximumf %13, %14 : vector<160x8xf32>
    %16 = vector.shape_cast %15 : vector<160x8xf32> to vector<10x16x8xf32>
    %cst_16 = arith.constant 0.000000e+00 : f32
    %17 = vector.broadcast %cst_16 : f32 to vector<1x16x8xf32>
    %c0_i32 = arith.constant 0 : i32
    %18 = arith.cmpi sgt, %arg1, %c0_i32 : i32
    %19 = vector.extract_strided_slice %16 {offsets = [0, 0, 0], sizes = [1, 16, 8], strides = [1, 1, 1]} : vector<10x16x8xf32> to vector<1x16x8xf32>
    %20 = arith.select %18, %19, %17 : vector<1x16x8xf32>
    %c1_i32 = arith.constant 1 : i32
    %21 = arith.cmpi slt, %arg1, %c1_i32 : i32
    %22 = vector.extract_strided_slice %16 {offsets = [9, 0, 0], sizes = [1, 16, 8], strides = [1, 1, 1]} : vector<10x16x8xf32> to vector<1x16x8xf32>
    %23 = arith.select %21, %22, %17 : vector<1x16x8xf32>
    %24 = vector.extract_strided_slice %16 {offsets = [1, 0, 0], sizes = [8, 16, 8], strides = [1, 1, 1]} : vector<10x16x8xf32> to vector<8x16x8xf32>
    %25 = tpu.concatenate %20, %24, %23 in 0 : vector<1x16x8xf32>, vector<8x16x8xf32>, vector<1x16x8xf32> -> vector<10x16x8xf32>
    %c0_17 = arith.constant 0 : index
    %c0_18 = arith.constant 0 : index
    %26 = vector.load %arg7[%c0_17, %c0_18] : memref<9x8xf32, #tpu.memory_space<vmem>>, vector<9x8xf32>
    %27 = vector.extract_strided_slice %26 {offsets = [0, 0], sizes = [1, 8], strides = [1, 1]} : vector<9x8xf32> to vector<1x8xf32>
    %28 = vector.shape_cast %27 : vector<1x8xf32> to vector<8xf32>
    %29 = vector.shape_cast %28 : vector<8xf32> to vector<1x1x8xf32>
    %30 = vector.extract_strided_slice %26 {offsets = [1, 0], sizes = [1, 8], strides = [1, 1]} : vector<9x8xf32> to vector<1x8xf32>
    %31 = vector.shape_cast %30 : vector<1x8xf32> to vector<8xf32>
    %32 = vector.shape_cast %31 : vector<8xf32> to vector<1x1x8xf32>
    %33 = vector.extract_strided_slice %26 {offsets = [2, 0], sizes = [1, 8], strides = [1, 1]} : vector<9x8xf32> to vector<1x8xf32>
    %34 = vector.shape_cast %33 : vector<1x8xf32> to vector<8xf32>
    %35 = vector.shape_cast %34 : vector<8xf32> to vector<1x1x8xf32>
    %36 = vector.extract_strided_slice %26 {offsets = [3, 0], sizes = [1, 8], strides = [1, 1]} : vector<9x8xf32> to vector<1x8xf32>
    %37 = vector.shape_cast %36 : vector<1x8xf32> to vector<8xf32>
    %38 = vector.shape_cast %37 : vector<8xf32> to vector<1x1x8xf32>
    %39 = vector.extract_strided_slice %26 {offsets = [4, 0], sizes = [1, 8], strides = [1, 1]} : vector<9x8xf32> to vector<1x8xf32>
    %40 = vector.shape_cast %39 : vector<1x8xf32> to vector<8xf32>
    %41 = vector.shape_cast %40 : vector<8xf32> to vector<1x1x8xf32>
    %42 = vector.extract_strided_slice %26 {offsets = [5, 0], sizes = [1, 8], strides = [1, 1]} : vector<9x8xf32> to vector<1x8xf32>
    %43 = vector.shape_cast %42 : vector<1x8xf32> to vector<8xf32>
    %44 = vector.shape_cast %43 : vector<8xf32> to vector<1x1x8xf32>
    %45 = vector.extract_strided_slice %26 {offsets = [6, 0], sizes = [1, 8], strides = [1, 1]} : vector<9x8xf32> to vector<1x8xf32>
    %46 = vector.shape_cast %45 : vector<1x8xf32> to vector<8xf32>
    %47 = vector.shape_cast %46 : vector<8xf32> to vector<1x1x8xf32>
    %48 = vector.extract_strided_slice %26 {offsets = [7, 0], sizes = [1, 8], strides = [1, 1]} : vector<9x8xf32> to vector<1x8xf32>
    %49 = vector.shape_cast %48 : vector<1x8xf32> to vector<8xf32>
    %50 = vector.shape_cast %49 : vector<8xf32> to vector<1x1x8xf32>
    %51 = vector.extract_strided_slice %26 {offsets = [8, 0], sizes = [1, 8], strides = [1, 1]} : vector<9x8xf32> to vector<1x8xf32>
    %52 = vector.shape_cast %51 : vector<1x8xf32> to vector<8xf32>
    %53 = vector.shape_cast %52 : vector<8xf32> to vector<1x1x8xf32>
    %c0_19 = arith.constant 0 : index
    %c0_20 = arith.constant 0 : index
    %54 = vector.load %arg8[%c0_19, %c0_20] : memref<1x8xf32, #tpu.memory_space<vmem>>, vector<1x8xf32>
    %55 = vector.shape_cast %54 : vector<1x8xf32> to vector<1x1x8xf32>
    %cst_21 = arith.constant 0.000000e+00 : f32
    %56 = vector.broadcast %cst_21 : f32 to vector<8x16x8xf32>
    %cst_22 = arith.constant 0.000000e+00 : f32
    %57 = vector.broadcast %cst_22 : f32 to vector<10x1x8xf32>
    %58 = vector.extract_strided_slice %25 {offsets = [0, 0, 0], sizes = [10, 15, 8], strides = [1, 1, 1]} : vector<10x16x8xf32> to vector<10x15x8xf32>
    %59 = tpu.concatenate %57, %58 in 1 : vector<10x1x8xf32>, vector<10x15x8xf32> -> vector<10x16x8xf32>
    %60 = vector.extract_strided_slice %25 {offsets = [0, 1, 0], sizes = [10, 15, 8], strides = [1, 1, 1]} : vector<10x16x8xf32> to vector<10x15x8xf32>
    %61 = tpu.concatenate %60, %57 in 1 : vector<10x15x8xf32>, vector<10x1x8xf32> -> vector<10x16x8xf32>
    %62 = vector.extract_strided_slice %59 {offsets = [0, 0, 0], sizes = [8, 16, 8], strides = [1, 1, 1]} : vector<10x16x8xf32> to vector<8x16x8xf32>
    %63 = vector.broadcast %29 : vector<1x1x8xf32> to vector<8x16x8xf32>
    %64 = arith.mulf %62, %63 : vector<8x16x8xf32>
    %65 = arith.addf %56, %64 : vector<8x16x8xf32>
    %66 = vector.extract_strided_slice %25 {offsets = [0, 0, 0], sizes = [8, 16, 8], strides = [1, 1, 1]} : vector<10x16x8xf32> to vector<8x16x8xf32>
    %67 = vector.broadcast %32 : vector<1x1x8xf32> to vector<8x16x8xf32>
    %68 = arith.mulf %66, %67 : vector<8x16x8xf32>
    %69 = arith.addf %65, %68 : vector<8x16x8xf32>
    %70 = vector.extract_strided_slice %61 {offsets = [0, 0, 0], sizes = [8, 16, 8], strides = [1, 1, 1]} : vector<10x16x8xf32> to vector<8x16x8xf32>
    %71 = vector.broadcast %35 : vector<1x1x8xf32> to vector<8x16x8xf32>
    %72 = arith.mulf %70, %71 : vector<8x16x8xf32>
    %73 = arith.addf %69, %72 : vector<8x16x8xf32>
    %74 = vector.extract_strided_slice %59 {offsets = [1, 0, 0], sizes = [8, 16, 8], strides = [1, 1, 1]} : vector<10x16x8xf32> to vector<8x16x8xf32>
    %75 = vector.broadcast %38 : vector<1x1x8xf32> to vector<8x16x8xf32>
    %76 = arith.mulf %74, %75 : vector<8x16x8xf32>
    %77 = arith.addf %73, %76 : vector<8x16x8xf32>
    %78 = vector.extract_strided_slice %25 {offsets = [1, 0, 0], sizes = [8, 16, 8], strides = [1, 1, 1]} : vector<10x16x8xf32> to vector<8x16x8xf32>
    %79 = vector.broadcast %41 : vector<1x1x8xf32> to vector<8x16x8xf32>
    %80 = arith.mulf %78, %79 : vector<8x16x8xf32>
    %81 = arith.addf %77, %80 : vector<8x16x8xf32>
    %82 = vector.extract_strided_slice %61 {offsets = [1, 0, 0], sizes = [8, 16, 8], strides = [1, 1, 1]} : vector<10x16x8xf32> to vector<8x16x8xf32>
    %83 = vector.broadcast %44 : vector<1x1x8xf32> to vector<8x16x8xf32>
    %84 = arith.mulf %82, %83 : vector<8x16x8xf32>
    %85 = arith.addf %81, %84 : vector<8x16x8xf32>
    %86 = vector.extract_strided_slice %59 {offsets = [2, 0, 0], sizes = [8, 16, 8], strides = [1, 1, 1]} : vector<10x16x8xf32> to vector<8x16x8xf32>
    %87 = vector.broadcast %47 : vector<1x1x8xf32> to vector<8x16x8xf32>
    %88 = arith.mulf %86, %87 : vector<8x16x8xf32>
    %89 = arith.addf %85, %88 : vector<8x16x8xf32>
    %90 = vector.extract_strided_slice %25 {offsets = [2, 0, 0], sizes = [8, 16, 8], strides = [1, 1, 1]} : vector<10x16x8xf32> to vector<8x16x8xf32>
    %91 = vector.broadcast %50 : vector<1x1x8xf32> to vector<8x16x8xf32>
    %92 = arith.mulf %90, %91 : vector<8x16x8xf32>
    %93 = arith.addf %89, %92 : vector<8x16x8xf32>
    %94 = vector.extract_strided_slice %61 {offsets = [2, 0, 0], sizes = [8, 16, 8], strides = [1, 1, 1]} : vector<10x16x8xf32> to vector<8x16x8xf32>
    %95 = vector.broadcast %53 : vector<1x1x8xf32> to vector<8x16x8xf32>
    %96 = arith.mulf %94, %95 : vector<8x16x8xf32>
    %97 = arith.addf %93, %96 : vector<8x16x8xf32>
    %98 = vector.broadcast %55 : vector<1x1x8xf32> to vector<8x16x8xf32>
    %99 = arith.addf %97, %98 : vector<8x16x8xf32>
    %cst_23 = arith.constant 0.000000e+00 : f32
    %100 = vector.broadcast %cst_23 : f32 to vector<8x16x8xf32>
    %101 = arith.maximumf %99, %100 : vector<8x16x8xf32>
    %102 = vector.shape_cast %101 : vector<8x16x8xf32> to vector<128x8xf32>
    %103 = arith.truncf %102 : vector<128x8xf32> to vector<128x8xbf16>
    %c0_24 = arith.constant 0 : index
    %c0_25 = arith.constant 0 : index
    %104 = vector.load %arg9[%c0_24, %c0_25] : memref<8x4xbf16, #tpu.memory_space<vmem>>, vector<8x4xbf16>
    %cst_26 = arith.constant dense<0.000000e+00> : vector<128x4xf32>
    %105 = tpu.matmul %103, %104, %cst_26 {dimension_numbers = #tpu.dot_dimension_numbers<[1], [0], [0], [1], [0, 0, 1, 1], [], []>} : vector<128x8xbf16>, vector<8x4xbf16>, vector<128x4xf32> -> vector<128x4xf32>
    %c0_27 = arith.constant 0 : index
    %c0_28 = arith.constant 0 : index
    %106 = vector.load %arg10[%c0_27, %c0_28] : memref<1x4xf32, #tpu.memory_space<vmem>>, vector<1x4xf32>
    %107 = vector.broadcast %106 : vector<1x4xf32> to vector<128x4xf32>
    %108 = arith.addf %105, %107 : vector<128x4xf32>
    %109 = vector.shape_cast %1 : vector<8x16x4xf32> to vector<128x4xf32>
    %110 = arith.addf %108, %109 : vector<128x4xf32>
    %111 = vector.shape_cast %110 : vector<128x4xf32> to vector<1x8x16x4xf32>
    %c0_29 = arith.constant 0 : index
    %c0_30 = arith.constant 0 : index
    %c0_31 = arith.constant 0 : index
    %c0_32 = arith.constant 0 : index
    %112 = vector.load %arg11[%c0_29, %c0_30, %c0_31, %c0_32] : memref<1x8x16x4xf32, #tpu.memory_space<vmem>>, vector<1x8x16x4xf32>
    tpu.vector_store %arg11[%c0_29, %c0_30, %c0_31, %c0_32], %111 {strides = array<i32>} : memref<1x8x16x4xf32, #tpu.memory_space<vmem>>, vector<1x8x16x4xf32>,
    return
  }
  func.func @transform_0(%arg0: i32, %arg1: i32) -> (i32, i32, i32, i32) {
    %c8_i32 = arith.constant 8 : i32
    %0 = arith.muli %arg1, %c8_i32 : i32
    %c1_i32 = arith.constant 1 : i32
    %1 = arith.subi %0, %c1_i32 : i32
    %c0_i32 = arith.constant 0 : i32
    %2 = arith.maxsi %1, %c0_i32 : i32
    %c0_i32_0 = arith.constant 0 : i32
    %c0_i32_1 = arith.constant 0 : i32
    %c0_i32_2 = arith.constant 0 : i32
    return %arg0, %2, %c0_i32_0, %c0_i32_1 : i32, i32, i32, i32
  }
  func.func @transform_1(%arg0: i32, %arg1: i32) -> (i32, i32, i32, i32) {
    %c0_i32 = arith.constant 0 : i32
    %c0_i32_0 = arith.constant 0 : i32
    %c0_i32_1 = arith.constant 0 : i32
    return %arg0, %arg1, %c0_i32, %c0_i32_0 : i32, i32, i32, i32
  }
  func.func @transform_2(%arg0: i32, %arg1: i32) -> (i32, i32, i32, i32) {
    %c1_i32 = arith.constant 1 : i32
    %0 = arith.addi %arg1, %c1_i32 : i32
    %c8_i32 = arith.constant 8 : i32
    %1 = arith.muli %0, %c8_i32 : i32
    %c15_i32 = arith.constant 15 : i32
    %2 = arith.minsi %1, %c15_i32 : i32
    %c0_i32 = arith.constant 0 : i32
    %c0_i32_0 = arith.constant 0 : i32
    %c0_i32_1 = arith.constant 0 : i32
    return %arg0, %2, %c0_i32, %c0_i32_0 : i32, i32, i32, i32
  }
  func.func @transform_3(%arg0: i32, %arg1: i32) -> (i32, i32) {
    %c0_i32 = arith.constant 0 : i32
    %c0_i32_0 = arith.constant 0 : i32
    %c0_i32_1 = arith.constant 0 : i32
    return %c0_i32, %c0_i32_0 : i32, i32
  }
  func.func @transform_4(%arg0: i32, %arg1: i32) -> (i32, i32) {
    %c0_i32 = arith.constant 0 : i32
    %c0_i32_0 = arith.constant 0 : i32
    %c0_i32_1 = arith.constant 0 : i32
    return %c0_i32, %c0_i32_0 : i32, i32
  }
  func.func @transform_5(%arg0: i32, %arg1: i32) -> (i32, i32) {
    %c0_i32 = arith.constant 0 : i32
    %c0_i32_0 = arith.constant 0 : i32
    %c0_i32_1 = arith.constant 0 : i32
    return %c0_i32, %c0_i32_0 : i32, i32
  }
  func.func @transform_6(%arg0: i32, %arg1: i32) -> (i32, i32) {
    %c0_i32 = arith.constant 0 : i32
    %c0_i32_0 = arith.constant 0 : i32
    %c0_i32_1 = arith.constant 0 : i32
    return %c0_i32, %c0_i32_0 : i32, i32
  }
  func.func @transform_7(%arg0: i32, %arg1: i32) -> (i32, i32) {
    %c0_i32 = arith.constant 0 : i32
    %c0_i32_0 = arith.constant 0 : i32
    %c0_i32_1 = arith.constant 0 : i32
    return %c0_i32, %c0_i32_0 : i32, i32
  }
  func.func @transform_8(%arg0: i32, %arg1: i32) -> (i32, i32) {
    %c0_i32 = arith.constant 0 : i32
    %c0_i32_0 = arith.constant 0 : i32
    %c0_i32_1 = arith.constant 0 : i32
    return %c0_i32, %c0_i32_0 : i32, i32
  }
  func.func @transform_9(%arg0: i32, %arg1: i32) -> (i32, i32, i32, i32) {
    %c0_i32 = arith.constant 0 : i32
    %c0_i32_0 = arith.constant 0 : i32
    %c0_i32_1 = arith.constant 0 : i32
    return %arg0, %arg1, %c0_i32, %c0_i32_0 : i32, i32, i32, i32
  }
}

</mosaic_0001>

<llo_original>
// kernel: tpu_custom_call.1
$region0: #{tpu_custom_call.1}
  #allocation0 [shape = 'u32[]', space=smem, size = 0x4, offset = 0x4, fixed_abs, tag = 'smem constant byte address 0x4 - core index']
  #allocation1 [shape = 'u32[144,128]{1,0:T(1,128)}', space=vmem, size = 0x12000, scoped, tag = 'internal scratch']
  %s0 = inlined_call_operand.vmem [shape: f32[2,16,16,4], index: 0, kind: input, shape index: {}]
  %s1 = inlined_call_operand.vmem [shape: f32[2,16,16,4], index: 1, kind: input, shape index: {}]
  %s2 = inlined_call_operand.vmem [shape: f32[2,16,16,4], index: 2, kind: input, shape index: {}]
  %s3 = inlined_call_operand.vmem [shape: bf16[4,8], index: 3, kind: input, shape index: {}]
  %s4 = inlined_call_operand.vmem [shape: f32[1,8], index: 4, kind: input, shape index: {}]
  %s5 = inlined_call_operand.vmem [shape: f32[9,8], index: 5, kind: input, shape index: {}]
  %s6 = inlined_call_operand.vmem [shape: f32[1,8], index: 6, kind: input, shape index: {}]
  %s7 = inlined_call_operand.vmem [shape: bf16[8,4], index: 7, kind: input, shape index: {}]
  %s8 = inlined_call_operand.vmem [shape: f32[1,4], index: 8, kind: input, shape index: {}]
  %s9 = inlined_call_operand.vmem [shape: f32[2,16,16,4], index: 9, kind: output, shape index: {}]
  %s10 = sld [smem:[#allocation0]]
  $region69: #{tpu_custom_call.1} parent=0
    _
  %s12 = ssub.s32 1, %s10
  %s13 = scalar_select 0, %s12, %s10
  loop: start=0, step=1, limit=6
  $region2: #{tpu_custom_call.1} parent=0 // loop_pre_header
    _
  $region3: #{tpu_custom_call.1} parent=0 // loop_header
    %s15 = sphi 0, %s19
    %p16 = scmp.ge.s32.totalorder %s15, 6
    %s22 = sphi 0, %s34
    %s23 = sphi 0, %s30
    %s24 = sphi 0, %s22
    %s25 = sphi 0, %s23
    %s26 = sphi 0, %s24
    %s27 = sphi 0, %s25
    %s47 = sphi 0, %s49
    %s50 = sphi 0, %s47
    %s51 = sphi 0, %s50
    %s67 = sphi 0, %s51
    %s75 = sphi 0, %s77
    %s78 = sphi 0, %s75
    %s79 = sphi 0, %s78
    %s95 = sphi 0, %s79
    %s111 = sphi 0, %s113
    %s114 = sphi 0, %s111
    %s115 = sphi 0, %s114
    %s131 = sphi 0, %s115
    %s135 = sphi 0, %s135
    %s137 = sphi 0, %s135
    %s138 = sphi 0, %s137
    %s152 = sphi 0, %s138
    %s156 = sphi 0, %s156
    %s158 = sphi 0, %s156
    %s159 = sphi 0, %s158
    %s173 = sphi 0, %s159
    %s177 = sphi 0, %s177
    %s179 = sphi 0, %s177
    %s180 = sphi 0, %s179
    %s194 = sphi 0, %s180
    %s198 = sphi 0, %s198
    %s200 = sphi 0, %s198
    %s201 = sphi 0, %s200
    %s215 = sphi 0, %s201
    %s219 = sphi 0, %s219
    %s221 = sphi 0, %s219
    %s222 = sphi 0, %s221
    %s236 = sphi 0, %s222
    %s240 = sphi 0, %s240
    %s242 = sphi 0, %s240
    %s243 = sphi 0, %s242
    %s257 = sphi 0, %s243
    %s265 = sphi 0, %s267
    %s268 = sphi 0, %s265
    %s269 = sphi 0, %s268
    %s285 = sphi 0, %s269
  $region4: #{tpu_custom_call.1} parent=0 // loop_header_branch
    %18 = sbr.rel (%p16) target = $region8
  $region5: #{tpu_custom_call.1} parent=0 // loop_body
    %s20 = ssub.s32 %s15, 1
    %s21 = ssub.s32 %s15, 2
    %s28 = sadd.s32 1, %s23
    %p29 = scmp.ge.s32.totalorder %s28, 2
    %s30 = scalar_select %p29, 0, %s28
    %s31 = sadd.s32 1, %s22
    %s32 = scalar_select %p29, %s31, %s22
    %p33 = scmp.ge.s32.totalorder %s32, 2
    %s34 = scalar_select %p33, 0, %s32
    %s35 = smul.u32 %s23, 8
    %s36 = ssub.s32 %s35, 1
    %p37 = scmp.gt.s32.totalorder %s36, 0
    %s38 = scalar_select %p37, %s36, 0
    %s39 = smul.u32 %s30, 8
    %s40 = ssub.s32 %s39, 1
    %p41 = scmp.gt.s32.totalorder %s40, 0
    %s42 = scalar_select %p41, %s40, 0
    %s43 = ssub.s32 %s22, %s34
    %s44 = ssub.s32 %s38, %s42
    %s45 = sor.u32 %s43, %s44
    %p46 = scmp.eq.s32.totalorder %s45, 0
    %s48 = sadd.s32 %s47, 1
    %s49 = scalar_select %p46, %s47, %s48
    %p52 = pneg %p46
    %p53 = scmp.eq.s32.totalorder %s15, 3
    %p54 = por %p52, %p53
    %p55 = scmp.ne.s32.totalorder %s47, %s50
    %p56 = scmp.eq.s32.totalorder %s15, 0
    %p57 = por %p55, %p56
    %p58 = scmp.ne.s32.totalorder %s47, %s50
    %p59 = scmp.eq.s32.totalorder %s20, 3
    %p60 = por %p58, %p59
    %p61 = scmp.ne.s32.totalorder %s50, %s51
    %p62 = scmp.eq.s32.totalorder %s20, 0
    %p63 = por %p61, %p62
    %p64 = scmp.ne.s32.totalorder %s50, %s51
    %p65 = scmp.eq.s32.totalorder %s21, 3
    %p66 = por %p64, %p65
    %p68 = scmp.ne.s32.totalorder %s51, %s67
    %p69 = scmp.eq.s32.totalorder %s21, 0
    %p70 = por %p68, %p69
    %s71 = ssub.s32 %s22, %s34
    %s72 = ssub.s32 %s23, %s30
    %s73 = sor.u32 %s71, %s72
    %p74 = scmp.eq.s32.totalorder %s73, 0
    %s76 = sadd.s32 %s75, 1
    %s77 = scalar_select %p74, %s75, %s76
    %p80 = pneg %p74
    %p81 = scmp.eq.s32.totalorder %s15, 3
    %p82 = por %p80, %p81
    %p83 = scmp.ne.s32.totalorder %s75, %s78
    %p84 = scmp.eq.s32.totalorder %s15, 0
    %p85 = por %p83, %p84
    %p86 = scmp.ne.s32.totalorder %s75, %s78
    %p87 = scmp.eq.s32.totalorder %s20, 3
    %p88 = por %p86, %p87
    %p89 = scmp.ne.s32.totalorder %s78, %s79
    %p90 = scmp.eq.s32.totalorder %s20, 0
    %p91 = por %p89, %p90
    %p92 = scmp.ne.s32.totalorder %s78, %s79
    %p93 = scmp.eq.s32.totalorder %s21, 3
    %p94 = por %p92, %p93
    %p96 = scmp.ne.s32.totalorder %s79, %s95
    %p97 = scmp.eq.s32.totalorder %s21, 0
    %p98 = por %p96, %p97
    %s99 = sadd.s32 %s23, 1
    %s100 = smul.u32 %s99, 8
    %p101 = scmp.lt.s32.totalorder %s100, 15
    %s102 = scalar_select %p101, %s100, 15
    %s103 = sadd.s32 %s30, 1
    %s104 = smul.u32 %s103, 8
    %p105 = scmp.lt.s32.totalorder %s104, 15
    %s106 = scalar_select %p105, %s104, 15
    %s107 = ssub.s32 %s22, %s34
    %s108 = ssub.s32 %s102, %s106
    %s109 = sor.u32 %s107, %s108
    %p110 = scmp.eq.s32.totalorder %s109, 0
    %s112 = sadd.s32 %s111, 1
    %s113 = scalar_select %p110, %s111, %s112
    %p116 = pneg %p110
    %p117 = scmp.eq.s32.totalorder %s15, 3
    %p118 = por %p116, %p117
    %p119 = scmp.ne.s32.totalorder %s111, %s114
    %p120 = scmp.eq.s32.totalorder %s15, 0
    %p121 = por %p119, %p120
    %p122 = scmp.ne.s32.totalorder %s111, %s114
    %p123 = scmp.eq.s32.totalorder %s20, 3
    %p124 = por %p122, %p123
    %p125 = scmp.ne.s32.totalorder %s114, %s115
    %p126 = scmp.eq.s32.totalorder %s20, 0
    %p127 = por %p125, %p126
    %p128 = scmp.ne.s32.totalorder %s114, %s115
    %p129 = scmp.eq.s32.totalorder %s21, 3
    %p130 = por %p128, %p129
    %p132 = scmp.ne.s32.totalorder %s115, %s131
    %p133 = scmp.eq.s32.totalorder %s21, 0
    %p134 = por %p132, %p133
    %s136 = sadd.s32 %s135, 1
    %p139 = scmp.eq.s32.totalorder %s15, 3
    %p140 = scmp.ne.s32.totalorder %s135, %s137
    %p141 = scmp.eq.s32.totalorder %s15, 0
    %p142 = por %p140, %p141
    %p143 = scmp.ne.s32.totalorder %s135, %s137
    %p144 = scmp.eq.s32.totalorder %s20, 3
    %p145 = por %p143, %p144
    %p146 = scmp.ne.s32.totalorder %s137, %s138
    %p147 = scmp.eq.s32.totalorder %s20, 0
    %p148 = por %p146, %p147
    %p149 = scmp.ne.s32.totalorder %s137, %s138
    %p150 = scmp.eq.s32.totalorder %s21, 3
    %p151 = por %p149, %p150
    %p153 = scmp.ne.s32.totalorder %s138, %s152
    %p154 = scmp.eq.s32.totalorder %s21, 0
    %p155 = por %p153, %p154
    %s157 = sadd.s32 %s156, 1
    %p160 = scmp.eq.s32.totalorder %s15, 3
    %p161 = scmp.ne.s32.totalorder %s156, %s158
    %p162 = scmp.eq.s32.totalorder %s15, 0
    %p163 = por %p161, %p162
    %p164 = scmp.ne.s32.totalorder %s156, %s158
    %p165 = scmp.eq.s32.totalorder %s20, 3
    %p166 = por %p164, %p165
    %p167 = scmp.ne.s32.totalorder %s158, %s159
    %p168 = scmp.eq.s32.totalorder %s20, 0
    %p169 = por %p167, %p168
    %p170 = scmp.ne.s32.totalorder %s158, %s159
    %p171 = scmp.eq.s32.totalorder %s21, 3
    %p172 = por %p170, %p171
    %p174 = scmp.ne.s32.totalorder %s159, %s173
    %p175 = scmp.eq.s32.totalorder %s21, 0
    %p176 = por %p174, %p175
    %s178 = sadd.s32 %s177, 1
    %p181 = scmp.eq.s32.totalorder %s15, 3
    %p182 = scmp.ne.s32.totalorder %s177, %s179
    %p183 = scmp.eq.s32.totalorder %s15, 0
    %p184 = por %p182, %p183
    %p185 = scmp.ne.s32.totalorder %s177, %s179
    %p186 = scmp.eq.s32.totalorder %s20, 3
    %p187 = por %p185, %p186
    %p188 = scmp.ne.s32.totalorder %s179, %s180
    %p189 = scmp.eq.s32.totalorder %s20, 0
    %p190 = por %p188, %p189
    %p191 = scmp.ne.s32.totalorder %s179, %s180
    %p192 = scmp.eq.s32.totalorder %s21, 3
    %p193 = por %p191, %p192
    %p195 = scmp.ne.s32.totalorder %s180, %s194
    %p196 = scmp.eq.s32.totalorder %s21, 0
    %p197 = por %p195, %p196
    %s199 = sadd.s32 %s198, 1
    %p202 = scmp.eq.s32.totalorder %s15, 3
    %p203 = scmp.ne.s32.totalorder %s198, %s200
    %p204 = scmp.eq.s32.totalorder %s15, 0
    %p205 = por %p203, %p204
    %p206 = scmp.ne.s32.totalorder %s198, %s200
    %p207 = scmp.eq.s32.totalorder %s20, 3
    %p208 = por %p206, %p207
    %p209 = scmp.ne.s32.totalorder %s200, %s201
    %p210 = scmp.eq.s32.totalorder %s20, 0
    %p211 = por %p209, %p210
    %p212 = scmp.ne.s32.totalorder %s200, %s201
    %p213 = scmp.eq.s32.totalorder %s21, 3
    %p214 = por %p212, %p213
    %p216 = scmp.ne.s32.totalorder %s201, %s215
    %p217 = scmp.eq.s32.totalorder %s21, 0
    %p218 = por %p216, %p217
    %s220 = sadd.s32 %s219, 1
    %p223 = scmp.eq.s32.totalorder %s15, 3
    %p224 = scmp.ne.s32.totalorder %s219, %s221
    %p225 = scmp.eq.s32.totalorder %s15, 0
    %p226 = por %p224, %p225
    %p227 = scmp.ne.s32.totalorder %s219, %s221
    %p228 = scmp.eq.s32.totalorder %s20, 3
    %p229 = por %p227, %p228
    %p230 = scmp.ne.s32.totalorder %s221, %s222
    %p231 = scmp.eq.s32.totalorder %s20, 0
    %p232 = por %p230, %p231
    %p233 = scmp.ne.s32.totalorder %s221, %s222
    %p234 = scmp.eq.s32.totalorder %s21, 3
    %p235 = por %p233, %p234
    %p237 = scmp.ne.s32.totalorder %s222, %s236
    %p238 = scmp.eq.s32.totalorder %s21, 0
    %p239 = por %p237, %p238
    %s241 = sadd.s32 %s240, 1
    %p244 = scmp.eq.s32.totalorder %s15, 3
    %p245 = scmp.ne.s32.totalorder %s240, %s242
    %p246 = scmp.eq.s32.totalorder %s15, 0
    %p247 = por %p245, %p246
    %p248 = scmp.ne.s32.totalorder %s240, %s242
    %p249 = scmp.eq.s32.totalorder %s20, 3
    %p250 = por %p248, %p249
    %p251 = scmp.ne.s32.totalorder %s242, %s243
    %p252 = scmp.eq.s32.totalorder %s20, 0
    %p253 = por %p251, %p252
    %p254 = scmp.ne.s32.totalorder %s242, %s243
    %p255 = scmp.eq.s32.totalorder %s21, 3
    %p256 = por %p254, %p255
    %p258 = scmp.ne.s32.totalorder %s243, %s257
    %p259 = scmp.eq.s32.totalorder %s21, 0
    %p260 = por %p258, %p259
    %s261 = ssub.s32 %s22, %s34
    %s262 = ssub.s32 %s23, %s30
    %s263 = sor.u32 %s261, %s262
    %p264 = scmp.eq.s32.totalorder %s263, 0
    %s266 = sadd.s32 %s265, 1
    %s267 = scalar_select %p264, %s265, %s266
    %p270 = pneg %p264
    %p271 = scmp.eq.s32.totalorder %s15, 3
    %p272 = por %p270, %p271
    %p273 = scmp.ne.s32.totalorder %s265, %s268
    %p274 = scmp.eq.s32.totalorder %s15, 0
    %p275 = por %p273, %p274
    %p276 = scmp.ne.s32.totalorder %s265, %s268
    %p277 = scmp.eq.s32.totalorder %s20, 3
    %p278 = por %p276, %p277
    %p279 = scmp.ne.s32.totalorder %s268, %s269
    %p280 = scmp.eq.s32.totalorder %s20, 0
    %p281 = por %p279, %p280
    %p282 = scmp.ne.s32.totalorder %s268, %s269
    %p283 = scmp.eq.s32.totalorder %s21, 3
    %p284 = por %p282, %p283
    %p286 = scmp.ne.s32.totalorder %s269, %s285
    %p287 = scmp.eq.s32.totalorder %s21, 0
    %p288 = por %p286, %p287
    %p289 = scmp.le.s32.totalorder 1, %s15
    %p290 = scmp.lt.s32.totalorder %s15, 5
    %p291 = pnand %p289, %p290
    %p292 = pneg %p291
    // Predicated region
    $region9: #{tpu_custom_call.1} parent=5 // pred_check
      _
    $region10: #{tpu_custom_call.1} parent=5 // pred_check_branch
      %294 = sbr.rel (%p291) target = $region12
    $region11: #{tpu_custom_call.1} parent=5 // pred_region
      %s295 = ssub.s32 %s15, 1
      // Predicated region
      $region13: #{tpu_custom_call.1} parent=11 // pred_check
        %p296 = pneg %p148
      $region14: #{tpu_custom_call.1} parent=11 // pred_check_branch
        %298 = sbr.rel (%p296) target = $region16
      $region15: #{tpu_custom_call.1} parent=11 // pred_region
        _
      $region16: #{tpu_custom_call.1} parent=11 // pred_fallthru
        _
      // Predicated region
      $region17: #{tpu_custom_call.1} parent=11 // pred_check
        %p299 = pneg %p169
      $region18: #{tpu_custom_call.1} parent=11 // pred_check_branch
        %301 = sbr.rel (%p299) target = $region20
      $region19: #{tpu_custom_call.1} parent=11 // pred_region
        _
      $region20: #{tpu_custom_call.1} parent=11 // pred_fallthru
        _
      // Predicated region
      $region21: #{tpu_custom_call.1} parent=11 // pred_check
        %p302 = pneg %p190
      $region22: #{tpu_custom_call.1} parent=11 // pred_check_branch
        %304 = sbr.rel (%p302) target = $region24
      $region23: #{tpu_custom_call.1} parent=11 // pred_region
        _
      $region24: #{tpu_custom_call.1} parent=11 // pred_fallthru
        _
      // Predicated region
      $region25: #{tpu_custom_call.1} parent=11 // pred_check
        %p305 = pneg %p211
      $region26: #{tpu_custom_call.1} parent=11 // pred_check_branch
        %307 = sbr.rel (%p305) target = $region28
      $region27: #{tpu_custom_call.1} parent=11 // pred_region
        _
      $region28: #{tpu_custom_call.1} parent=11 // pred_fallthru
        _
      // Predicated region
      $region29: #{tpu_custom_call.1} parent=11 // pred_check
        %p308 = pneg %p232
      $region30: #{tpu_custom_call.1} parent=11 // pred_check_branch
        %310 = sbr.rel (%p308) target = $region32
      $region31: #{tpu_custom_call.1} parent=11 // pred_region
        _
      $region32: #{tpu_custom_call.1} parent=11 // pred_fallthru
        _
      // Predicated region
      $region33: #{tpu_custom_call.1} parent=11 // pred_check
        %p311 = pneg %p253
      $region34: #{tpu_custom_call.1} parent=11 // pred_check_branch
        %313 = sbr.rel (%p311) target = $region36
      $region35: #{tpu_custom_call.1} parent=11 // pred_region
        _
      $region36: #{tpu_custom_call.1} parent=11 // pred_fallthru
        _
    $region12: #{tpu_custom_call.1} parent=5 // pred_fallthru
      _
    %p314 = scmp.lt.s32.totalorder %s15, 4
    // Predicated region
    $region37: #{tpu_custom_call.1} parent=5 // pred_check
      %p315 = pneg %p314
    $region38: #{tpu_custom_call.1} parent=5 // pred_check_branch
      %317 = sbr.rel (%p315) target = $region40
    $region39: #{tpu_custom_call.1} parent=5 // pred_region
      // Predicated region
      $region41: #{tpu_custom_call.1} parent=39 // pred_check
        %p318 = pneg %p57
      $region42: #{tpu_custom_call.1} parent=39 // pred_check_branch
        %320 = sbr.rel (%p318) target = $region44
      $region43: #{tpu_custom_call.1} parent=39 // pred_region
        %s321 = smul.u32 %s23, 8
        %s322 = ssub.s32 %s321, 1
        %p323 = scmp.gt.s32.totalorder %s322, 0
        %s324 = scalar_select %p323, %s322, 0
        %p325 = scmp.lt.s32.totalorder %s22, 1
        %s326 = scalar_select %p325, %s22, 1
        %p327 = scmp.lt.s32.totalorder %s324, 15
        %s328 = scalar_select %p327, %s324, 15
        %s329 = smul.addr %s328, 2
        %s330 = smul.addr %s326, 32
        %s331 = sadd.s32 %s329, %s330
        %s332 = smul.addr %s331, 8
        %s333 = scalar_lea.vmem %s0, %s332
        %s334 = smul.u32 %s23, 8
        %s335 = ssub.s32 %s334, 1
        %p336 = scmp.gt.s32.totalorder %s335, 0
        %s337 = scalar_select %p336, %s335, 0
      $region44: #{tpu_custom_call.1} parent=39 // pred_fallthru
        _
      // Predicated region
      $region45: #{tpu_custom_call.1} parent=39 // pred_check
        %p338 = pneg %p85
      $region46: #{tpu_custom_call.1} parent=39 // pred_check_branch
        %340 = sbr.rel (%p338) target = $region48
      $region47: #{tpu_custom_call.1} parent=39 // pred_region
        %s341 = smul.u32 8, %s23
        %p342 = scmp.lt.s32.totalorder %s22, 1
        %s343 = scalar_select %p342, %s22, 1
        %p344 = scmp.lt.s32.totalorder %s341, 15
        %s345 = scalar_select %p344, %s341, 15
        %s346 = smul.addr %s345, 2
        %s347 = smul.addr %s343, 32
        %s348 = sadd.s32 %s346, %s347
        %s349 = smul.addr %s348, 8
        %s350 = scalar_lea.vmem %s1, %s349
        %s351 = smul.u32 8, %s23
      $region48: #{tpu_custom_call.1} parent=39 // pred_fallthru
        _
      // Predicated region
      $region49: #{tpu_custom_call.1} parent=39 // pred_check
        %p352 = pneg %p121
      $region50: #{tpu_custom_call.1} parent=39 // pred_check_branch
        %354 = sbr.rel (%p352) target = $region52
      $region51: #{tpu_custom_call.1} parent=39 // pred_region
        %s355 = sadd.s32 %s23, 1
        %s356 = smul.u32 %s355, 8
        %p357 = scmp.lt.s32.totalorder %s356, 15
        %s358 = scalar_select %p357, %s356, 15
        %p359 = scmp.lt.s32.totalorder %s22, 1
        %s360 = scalar_select %p359, %s22, 1
        %p361 = scmp.lt.s32.totalorder %s358, 15
        %s362 = scalar_select %p361, %s358, 15
        %s363 = smul.addr %s362, 2
        %s364 = smul.addr %s360, 32
        %s365 = sadd.s32 %s363, %s364
        %s366 = smul.addr %s365, 8
        %s367 = scalar_lea.vmem %s2, %s366
        %s368 = sadd.s32 %s23, 1
        %s369 = smul.u32 %s368, 8
        %p370 = scmp.lt.s32.totalorder %s369, 15
        %s371 = scalar_select %p370, %s369, 15
      $region52: #{tpu_custom_call.1} parent=39 // pred_fallthru
        _
    $region40: #{tpu_custom_call.1} parent=5 // pred_fallthru
      _
    %p372 = scmp.le.s32.totalorder 1, %s15
    %p373 = scmp.lt.s32.totalorder %s15, 5
    %p374 = pnand %p372, %p373
    %p375 = pneg %p374
    // Predicated region
    $region53: #{tpu_custom_call.1} parent=5 // pred_check
      _
    $region54: #{tpu_custom_call.1} parent=5 // pred_check_branch
      %377 = sbr.rel (%p374) target = $region56
    $region55: #{tpu_custom_call.1} parent=5 // pred_region
      %s378 = ssub.s32 %s15, 1
      %s379 = smul.u32 %s25, 8
      %s380 = ssub.s32 %s379, 1
      %p381 = scmp.gt.s32.totalorder %s380, 0
      %s382 = scalar_select %p381, %s380, 0
      %p383 = scmp.lt.s32.totalorder %s24, 1
      %s384 = scalar_select %p383, %s24, 1
      %p385 = scmp.lt.s32.totalorder %s382, 15
      %s386 = scalar_select %p385, %s382, 15
      %s387 = smul.addr %s386, 2
      %s388 = smul.addr %s384, 32
      %s389 = sadd.s32 %s387, %s388
      %s390 = smul.addr %s389, 8
      %s391 = scalar_lea.vmem %s0, %s390
      %p392 = pneg %p63
      %p393 = pneg %p60
      %s394 = smul.u32 8, %s25
      %p395 = scmp.lt.s32.totalorder %s24, 1
      %s396 = scalar_select %p395, %s24, 1
      %p397 = scmp.lt.s32.totalorder %s394, 15
      %s398 = scalar_select %p397, %s394, 15
      %s399 = smul.addr %s398, 2
      %s400 = smul.addr %s396, 32
      %s401 = sadd.s32 %s399, %s400
      %s402 = smul.addr %s401, 8
      %s403 = scalar_lea.vmem %s1, %s402
      %p404 = pneg %p91
      %p405 = pneg %p88
      %s406 = sadd.s32 %s25, 1
      %s407 = smul.u32 %s406, 8
      %p408 = scmp.lt.s32.totalorder %s407, 15
      %s409 = scalar_select %p408, %s407, 15
      %p410 = scmp.lt.s32.totalorder %s24, 1
      %s411 = scalar_select %p410, %s24, 1
      %p412 = scmp.lt.s32.totalorder %s409, 15
      %s413 = scalar_select %p412, %s409, 15
      %s414 = smul.addr %s413, 2
      %s415 = smul.addr %s411, 32
      %s416 = sadd.s32 %s414, %s415
      %s417 = smul.addr %s416, 8
      %s418 = scalar_lea.vmem %s2, %s417
      %p419 = pneg %p127
      %p420 = pneg %p124
      %p421 = pneg %p148
      %p422 = pneg %p145
      %p423 = pneg %p169
      %p424 = pneg %p166
      %p425 = pneg %p190
      %p426 = pneg %p187
      %p427 = pneg %p211
      %p428 = pneg %p208
      %p429 = pneg %p232
      %p430 = pneg %p229
      %p431 = pneg %p253
      %p432 = pneg %p250
      %p433 = pneg %p281
      %p434 = pneg %p278
      %s435 = smul.u32 8, %s25
      %p436 = scmp.lt.s32.totalorder %s24, 1
      %s437 = scalar_select %p436, %s24, 1
      %p438 = scmp.lt.s32.totalorder %s435, 15
      %s439 = scalar_select %p438, %s435, 15
      %s440 = smul.addr %s439, 2
      %s441 = smul.addr %s437, 32
      %s442 = sadd.s32 %s440, %s441
      %s443 = smul.addr %s442, 8
      %s444 = scalar_lea.vmem %s9, %s443
      %s445 = smul.u32 %s25, 8
      %s446 = ssub.s32 %s445, 1
      %p447 = scmp.gt.s32.totalorder %s446, 0
      %s448 = scalar_select %p447, %s446, 0
      %p449 = scmp.lt.s32.totalorder %s24, 1
      %s450 = scalar_select %p449, %s24, 1
      %p451 = scmp.lt.s32.totalorder %s448, 15
      %s452 = scalar_select %p451, %s448, 15
      %s453 = smul.addr %s452, 2
      %s454 = smul.addr %s450, 32
      %s455 = sadd.s32 %s453, %s454
      %s456 = smul.addr %s455, 8
      %s457 = scalar_lea.vmem %s0, %s456
      %s458 = smul.u32 %s25, 8
      %s459 = ssub.s32 %s458, 1
      %p460 = scmp.gt.s32.totalorder %s459, 0
      %s461 = scalar_select %p460, %s459, 0
      %s462 = smul.u32 8, %s25
      %p463 = scmp.lt.s32.totalorder %s24, 1
      %s464 = scalar_select %p463, %s24, 1
      %p465 = scmp.lt.s32.totalorder %s462, 15
      %s466 = scalar_select %p465, %s462, 15
      %s467 = smul.addr %s466, 2
      %s468 = smul.addr %s464, 32
      %s469 = sadd.s32 %s467, %s468
      %s470 = smul.addr %s469, 8
      %s471 = scalar_lea.vmem %s1, %s470
      %s472 = smul.u32 8, %s25
      %s473 = sadd.s32 %s25, 1
      %s474 = smul.u32 %s473, 8
      %p475 = scmp.lt.s32.totalorder %s474, 15
      %s476 = scalar_select %p475, %s474, 15
      %p477 = scmp.lt.s32.totalorder %s24, 1
      %s478 = scalar_select %p477, %s24, 1
      %p479 = scmp.lt.s32.totalorder %s476, 15
      %s480 = scalar_select %p479, %s476, 15
      %s481 = smul.addr %s480, 2
      %s482 = smul.addr %s478, 32
      %s483 = sadd.s32 %s481, %s482
      %s484 = smul.addr %s483, 8
      %s485 = scalar_lea.vmem %s2, %s484
      %s486 = sadd.s32 %s25, 1
      %s487 = smul.u32 %s486, 8
      %p488 = scmp.lt.s32.totalorder %s487, 15
      %s489 = scalar_select %p488, %s487, 15
      %s490 = smul.u32 8, %s25
      %p491 = scmp.lt.s32.totalorder %s24, 1
      %s492 = scalar_select %p491, %s24, 1
      %p493 = scmp.lt.s32.totalorder %s490, 15
      %s494 = scalar_select %p493, %s490, 15
      %s495 = smul.addr %s494, 2
      %s496 = smul.addr %s492, 32
      %s497 = sadd.s32 %s495, %s496
      %s498 = smul.addr %s497, 8
      %s499 = scalar_lea.vmem %s9, %s498
      %s500 = smul.u32 8, %s25
      %v502 = vld [vmem:[%s471] sm:$0xff]
      %v503 = vld [vmem:[%s471 + $0x8] sm:$0xff]
      %v504 = vld [vmem:[%s471 + $0x10] sm:$0xff]
      %v505 = vld [vmem:[%s471 + $0x18] sm:$0xff]
      %v506 = vld [vmem:[%s471 + $0x20] sm:$0xff]
      %v507 = vld [vmem:[%s471 + $0x28] sm:$0xff]
      %v508 = vld [vmem:[%s471 + $0x30] sm:$0xff]
      %v509 = vld [vmem:[%s471 + $0x38] sm:$0xff]
      %v510 = vld [vmem:[%s471 + $0x40] sm:$0xff]
      %v511 = vld [vmem:[%s471 + $0x48] sm:$0xff]
      %v512 = vld [vmem:[%s471 + $0x50] sm:$0xff]
      %v513 = vld [vmem:[%s471 + $0x58] sm:$0xff]
      %v514 = vld [vmem:[%s471 + $0x60] sm:$0xff]
      %v515 = vld [vmem:[%s471 + $0x68] sm:$0xff]
      %v516 = vld [vmem:[%s471 + $0x70] sm:$0xff]
      %v517 = vld [vmem:[%s471 + $0x78] sm:$0xff]
      %v518 = vld [vmem:[%s457] sm:$0xff]
      %v519 = vld [vmem:[%s457 + $0x8] sm:$0xff]
      %v520 = vld [vmem:[%s485] sm:$0xff]
      %v521 = vld [vmem:[%s485 + $0x8] sm:$0xff]
      %v522 = vpack.c.bf16 %v519, %v518
      %v523 = vpack.c.bf16 %v503, %v502
      %v524 = vpack.c.bf16 %v505, %v504
      %v525 = vpack.c.bf16 %v507, %v506
      %v526 = vpack.c.bf16 %v509, %v508
      %v527 = vpack.c.bf16 %v511, %v510
      %v528 = vpack.c.bf16 %v513, %v512
      %v529 = vpack.c.bf16 %v515, %v514
      %v530 = vpack.c.bf16 %v517, %v516
      %v531 = vpack.c.bf16 %v521, %v520
      %v532 = vld [vmem:[%s3] sm:$0x3]
      %v533 = vld [vmem:[%s4] sm:$0x1]
      %v535 = vlaneseq
      %v536 = vshrl.u32 %v535, 7
      %v537 = vsub.s32 0, %v536
      %v538 = vrot.slane %v533, %v537
      %vm540 = vcmask 31744
      %v542 = vsel %vm540, %v522, 0
      %v545 = vsel %vm540, %v523, 0
      %v548 = vsel %vm540, %v524, 0
      %v551 = vsel %vm540, %v525, 0
      %v554 = vsel %vm540, %v526, 0
      %v557 = vsel %vm540, %v527, 0
      %v560 = vsel %vm540, %v528, 0
      %v563 = vsel %vm540, %v529, 0
      %v566 = vsel %vm540, %v530, 0
      %v569 = vsel %vm540, %v531, 0
      %vm571 = vcmask 1041408
      %v573 = vsel %vm571, %v532, 0
      %575 = vmatprep.subr.bf16.mxu0 0
      %576 = vmatpush1.bf16.msra.mxu0 %v573
      %577 = vmatprep.subr.bf16.mxu0 0
      %578 = vmatpush1.bf16.msra.mxu0 0
      %579 = vmatprep.subr.bf16.mxu0 0
      %580 = vmatpush1.bf16.msra.mxu0 0
      %581 = vmatprep.subr.bf16.mxu0 0
      %582 = vmatpush1.bf16.msra.mxu0 0
      %583 = vmatprep.subr.bf16.mxu0 0
      %584 = vmatpush1.bf16.msra.mxu0 0
      %585 = vmatprep.subr.bf16.mxu0 0
      %586 = vmatpush1.bf16.msra.mxu0 0
      %587 = vmatprep.subr.bf16.mxu0 0
      %588 = vmatpush1.bf16.msra.mxu0 0
      %589 = vmatprep.subr.bf16.mxu0 0
      %590 = vmatpush1.bf16.msra.mxu0 0
      %591 = vmatprep.subr.bf16.mxu0 0
      %592 = vmatpush1.bf16.msra.mxu0 0
      %593 = vmatprep.subr.bf16.mxu0 0
      %594 = vmatpush1.bf16.msra.mxu0 0
      %595 = vmatprep.subr.bf16.mxu0 0
      %596 = vmatpush1.bf16.msra.mxu0 0
      %597 = vmatprep.subr.bf16.mxu0 0
      %598 = vmatpush1.bf16.msra.mxu0 0
      %599 = vmatprep.subr.bf16.mxu0 0
      %600 = vmatpush1.bf16.msra.mxu0 0
      %601 = vmatprep.subr.bf16.mxu0 0
      %602 = vmatpush1.bf16.msra.mxu0 0
      %603 = vmatprep.subr.bf16.mxu0 0
      %604 = vmatpush1.bf16.msra.mxu0 0
      %605 = vmatprep.subr.bf16.mxu0 0
      %606 = vmatpush1.bf16.msra.mxu0 0
      %607 = vmatprep.mubr.bf16.mxu0 0
      %608 = vmatmul.mubr.bf16.gmra.mrb[0].mxu0 %v542
      %v609 = vpop.f32.mrb[0].mxu0
      %v610 = vadd.f32 %v538, %v609
      %v611 = vpop.f32.mrb[0].mxu0
      %v612 = vpop.f32.mrb[0].mxu0
      %v613 = vadd.f32 %v538, %v612
      %v614 = vpop.f32.mrb[0].mxu0
      %615 = vmatprep.mubr.bf16.mxu0 0
      %616 = vmatmul.mubr.bf16.gmra.mrb[0].mxu0 %v545
      %v617 = vpop.f32.mrb[0].mxu0
      %v618 = vadd.f32 %v538, %v617
      %v619 = vpop.f32.mrb[0].mxu0
      %v620 = vpop.f32.mrb[0].mxu0
      %v621 = vadd.f32 %v538, %v620
      %v622 = vpop.f32.mrb[0].mxu0
      %623 = vmatprep.mubr.bf16.mxu0 0
      %624 = vmatmul.mubr.bf16.gmra.mrb[0].mxu0 %v548
      %v625 = vpop.f32.mrb[0].mxu0
      %v626 = vadd.f32 %v538, %v625
      %v627 = vpop.f32.mrb[0].mxu0
      %v628 = vpop.f32.mrb[0].mxu0
      %v629 = vadd.f32 %v538, %v628
      %v630 = vpop.f32.mrb[0].mxu0
      %631 = vmatprep.mubr.bf16.mxu0 0
      %632 = vmatmul.mubr.bf16.gmra.mrb[0].mxu0 %v551
      %v633 = vpop.f32.mrb[0].mxu0
      %v634 = vadd.f32 %v538, %v633
      %v635 = vpop.f32.mrb[0].mxu0
      %v636 = vpop.f32.mrb[0].mxu0
      %v637 = vadd.f32 %v538, %v636
      %v638 = vpop.f32.mrb[0].mxu0
      %639 = vmatprep.mubr.bf16.mxu0 0
      %640 = vmatmul.mubr.bf16.gmra.mrb[0].mxu0 %v554
      %v641 = vpop.f32.mrb[0].mxu0
      %v642 = vadd.f32 %v538, %v641
      %v643 = vpop.f32.mrb[0].mxu0
      %v644 = vpop.f32.mrb[0].mxu0
      %v645 = vadd.f32 %v538, %v644
      %v646 = vpop.f32.mrb[0].mxu0
      %647 = vmatprep.mubr.bf16.mxu0 0
      %648 = vmatmul.mubr.bf16.gmra.mrb[0].mxu0 %v557
      %v649 = vpop.f32.mrb[0].mxu0
      %v650 = vadd.f32 %v538, %v649
      %v651 = vpop.f32.mrb[0].mxu0
      %v652 = vpop.f32.mrb[0].mxu0
      %v653 = vadd.f32 %v538, %v652
      %v654 = vpop.f32.mrb[0].mxu0
      %655 = vmatprep.mubr.bf16.mxu0 0
      %656 = vmatmul.mubr.bf16.gmra.mrb[0].mxu0 %v560
      %v657 = vpop.f32.mrb[0].mxu0
      %v658 = vadd.f32 %v538, %v657
      %v659 = vpop.f32.mrb[0].mxu0
      %v660 = vpop.f32.mrb[0].mxu0
      %v661 = vadd.f32 %v538, %v660
      %v662 = vpop.f32.mrb[0].mxu0
      %663 = vmatprep.mubr.bf16.mxu0 0
      %664 = vmatmul.mubr.bf16.gmra.mrb[0].mxu0 %v563
      %v665 = vpop.f32.mrb[0].mxu0
      %v666 = vadd.f32 %v538, %v665
      %v667 = vpop.f32.mrb[0].mxu0
      %v668 = vpop.f32.mrb[0].mxu0
      %v669 = vadd.f32 %v538, %v668
      %v670 = vpop.f32.mrb[0].mxu0
      %671 = vmatprep.mubr.bf16.mxu0 0
      %672 = vmatmul.mubr.bf16.gmra.mrb[0].mxu0 %v566
      %v673 = vpop.f32.mrb[0].mxu0
      %v674 = vadd.f32 %v538, %v673
      %v675 = vpop.f32.mrb[0].mxu0
      %v676 = vpop.f32.mrb[0].mxu0
      %v677 = vadd.f32 %v538, %v676
      %v678 = vpop.f32.mrb[0].mxu0
      %679 = vmatprep.mubr.bf16.mxu0 0
      %680 = vmatmul.mubr.bf16.gmra.mrb[0].mxu0 %v569
      %v681 = vpop.f32.mrb[0].mxu0
      %v682 = vadd.f32 %v538, %v681
      %v683 = vpop.f32.mrb[0].mxu0
      %v684 = vpop.f32.mrb[0].mxu0
      %v685 = vadd.f32 %v538, %v684
      %v686 = vpop.f32.mrb[0].mxu0
      %687 = vdwg.mxu0
      %v688 = vmax.f32 %v610, 0.0
      %v689 = vmax.f32 %v613, 0.0
      %v690 = vmax.f32 %v618, 0.0
      %v691 = vmax.f32 %v621, 0.0
      %v692 = vmax.f32 %v626, 0.0
      %v693 = vmax.f32 %v629, 0.0
      %v694 = vmax.f32 %v634, 0.0
      %v695 = vmax.f32 %v637, 0.0
      %v696 = vmax.f32 %v642, 0.0
      %v697 = vmax.f32 %v645, 0.0
      %v698 = vmax.f32 %v650, 0.0
      %v699 = vmax.f32 %v653, 0.0
      %v700 = vmax.f32 %v658, 0.0
      %v701 = vmax.f32 %v661, 0.0
      %v702 = vmax.f32 %v666, 0.0
      %v703 = vmax.f32 %v669, 0.0
      %v704 = vmax.f32 %v674, 0.0
      %v705 = vmax.f32 %v677, 0.0
      %v706 = vmax.f32 %v682, 0.0
      %v707 = vmax.f32 %v685, 0.0
      %p708 = scmp.gt.s32.totalorder %s25, 0
      %s709 = scalar_select %p708, 1, 0
      %v710 = vstv %s709
      %vm711 = vcmp.eq.s32.totalorder %v710, 1
      %v712 = vsel %vm711, %v688, 0.0
      %v713 = vsel %vm711, %v689, 0.0
      %p714 = scmp.lt.s32.totalorder %s25, 1
      %s715 = scalar_select %p714, 1, 0
      %v716 = vstv %s715
      %vm717 = vcmp.eq.s32.totalorder %v716, 1
      %v718 = vsel %vm717, %v706, 0.0
      %v719 = vsel %vm717, %v707, 0.0
      %v720 = vld [vmem:[%s5] sm:$0xff]
      %v721 = vld [vmem:[%s5 + $0x8] sm:$0x1]
      %v722 = vld [vmem:[%s6] sm:$0x1]
      %vm743 = vcmask 1040384
      %v744 = vrot.slane %v712, 7
      %v745 = vrot.slane %v713, 7
      %v746 = vsel %vm743, %v744, %v745
      %v747 = vrot.slane %v690, 7
      %v748 = vrot.slane %v691, 7
      %v749 = vsel %vm743, %v747, %v748
      %v750 = vrot.slane %v692, 7
      %v751 = vrot.slane %v693, 7
      %v752 = vsel %vm743, %v750, %v751
      %v753 = vrot.slane %v694, 7
      %v754 = vrot.slane %v695, 7
      %v755 = vsel %vm743, %v753, %v754
      %v756 = vrot.slane %v696, 7
      %v757 = vrot.slane %v697, 7
      %v758 = vsel %vm743, %v756, %v757
      %v759 = vrot.slane %v698, 7
      %v760 = vrot.slane %v699, 7
      %v761 = vsel %vm743, %v759, %v760
      %v762 = vrot.slane %v700, 7
      %v763 = vrot.slane %v701, 7
      %v764 = vsel %vm743, %v762, %v763
      %v765 = vrot.slane %v702, 7
      %v766 = vrot.slane %v703, 7
      %v767 = vsel %vm743, %v765, %v766
      %v768 = vrot.slane %v704, 7
      %v769 = vrot.slane %v705, 7
      %v770 = vsel %vm743, %v768, %v769
      %v771 = vrot.slane %v718, 7
      %v772 = vrot.slane %v719, 7
      %v773 = vsel %vm743, %v771, %v772
      %v794 = vsel %vm743, 0.0, %v744
      %v795 = vsel %vm743, 0.0, %v747
      %v796 = vsel %vm743, 0.0, %v750
      %v797 = vsel %vm743, 0.0, %v753
      %v798 = vsel %vm743, 0.0, %v756
      %v799 = vsel %vm743, 0.0, %v759
      %v800 = vsel %vm743, 0.0, %v762
      %v801 = vsel %vm743, 0.0, %v765
      %v802 = vsel %vm743, 0.0, %v768
      %v803 = vsel %vm743, 0.0, %v771
      %vm804 = vcmask 1046528
      %v805 = vrot.slane %v712, 1
      %v806 = vrot.slane %v713, 1
      %v807 = vsel %vm804, %v805, %v806
      %v808 = vrot.slane %v690, 1
      %v809 = vrot.slane %v691, 1
      %v810 = vsel %vm804, %v808, %v809
      %v811 = vrot.slane %v692, 1
      %v812 = vrot.slane %v693, 1
      %v813 = vsel %vm804, %v811, %v812
      %v814 = vrot.slane %v694, 1
      %v815 = vrot.slane %v695, 1
      %v816 = vsel %vm804, %v814, %v815
      %v817 = vrot.slane %v696, 1
      %v818 = vrot.slane %v697, 1
      %v819 = vsel %vm804, %v817, %v818
      %v820 = vrot.slane %v698, 1
      %v821 = vrot.slane %v699, 1
      %v822 = vsel %vm804, %v820, %v821
      %v823 = vrot.slane %v700, 1
      %v824 = vrot.slane %v701, 1
      %v825 = vsel %vm804, %v823, %v824
      %v826 = vrot.slane %v702, 1
      %v827 = vrot.slane %v703, 1
      %v828 = vsel %vm804, %v826, %v827
      %v829 = vrot.slane %v704, 1
      %v830 = vrot.slane %v705, 1
      %v831 = vsel %vm804, %v829, %v830
      %v832 = vrot.slane %v718, 1
      %v833 = vrot.slane %v719, 1
      %v834 = vsel %vm804, %v832, %v833
      %v855 = vsel %vm804, %v806, 0.0
      %v856 = vsel %vm804, %v809, 0.0
      %v857 = vsel %vm804, %v812, 0.0
      %v858 = vsel %vm804, %v815, 0.0
      %v859 = vsel %vm804, %v818, 0.0
      %v860 = vsel %vm804, %v821, 0.0
      %v861 = vsel %vm804, %v824, 0.0
      %v862 = vsel %vm804, %v827, 0.0
      %v863 = vsel %vm804, %v830, 0.0
      %v864 = vsel %vm804, %v833, 0.0
      %v865 = vlaneseq
      %v866 = vshrl.u32 %v865, 7
      %v867 = vsub.s32 0, %v866
      %v868 = vrot.slane %v720, %v867
      %v869 = vmul.f32 %v794, %v868
      %v870 = vmul.f32 %v746, %v868
      %v871 = vmul.f32 %v795, %v868
      %v872 = vmul.f32 %v749, %v868
      %v873 = vmul.f32 %v796, %v868
      %v874 = vmul.f32 %v752, %v868
      %v875 = vmul.f32 %v797, %v868
      %v876 = vmul.f32 %v755, %v868
      %v877 = vmul.f32 %v798, %v868
      %v878 = vmul.f32 %v758, %v868
      %v879 = vmul.f32 %v799, %v868
      %v880 = vmul.f32 %v761, %v868
      %v881 = vmul.f32 %v800, %v868
      %v882 = vmul.f32 %v764, %v868
      %v883 = vmul.f32 %v801, %v868
      %v884 = vmul.f32 %v767, %v868
      %v885 = vadd.f32 %v869, 0.0
      %v886 = vadd.f32 %v870, 0.0
      %v887 = vadd.f32 %v871, 0.0
      %v888 = vadd.f32 %v872, 0.0
      %v889 = vadd.f32 %v873, 0.0
      %v890 = vadd.f32 %v874, 0.0
      %v891 = vadd.f32 %v875, 0.0
      %v892 = vadd.f32 %v876, 0.0
      %v893 = vadd.f32 %v877, 0.0
      %v894 = vadd.f32 %v878, 0.0
      %v895 = vadd.f32 %v879, 0.0
      %v896 = vadd.f32 %v880, 0.0
      %v897 = vadd.f32 %v881, 0.0
      %v898 = vadd.f32 %v882, 0.0
      %v899 = vadd.f32 %v883, 0.0
      %v900 = vadd.f32 %v884, 0.0
      %v901 = vlaneseq
      %v902 = vshrl.u32 %v901, 7
      %v903 = vsub.s32 1, %v902
      %v904 = vrot.slane %v720, %v903
      %v905 = vmul.f32 %v712, %v904
      %v906 = vmul.f32 %v713, %v904
      %v907 = vmul.f32 %v690, %v904
      %v908 = vmul.f32 %v691, %v904
      %v909 = vmul.f32 %v692, %v904
      %v910 = vmul.f32 %v693, %v904
      %v911 = vmul.f32 %v694, %v904
      %v912 = vmul.f32 %v695, %v904
      %v913 = vmul.f32 %v696, %v904
      %v914 = vmul.f32 %v697, %v904
      %v915 = vmul.f32 %v698, %v904
      %v916 = vmul.f32 %v699, %v904
      %v917 = vmul.f32 %v700, %v904
      %v918 = vmul.f32 %v701, %v904
      %v919 = vmul.f32 %v702, %v904
      %v920 = vmul.f32 %v703, %v904
      %v921 = vadd.f32 %v885, %v905
      %v922 = vadd.f32 %v886, %v906
      %v923 = vadd.f32 %v887, %v907
      %v924 = vadd.f32 %v888, %v908
      %v925 = vadd.f32 %v889, %v909
      %v926 = vadd.f32 %v890, %v910
      %v927 = vadd.f32 %v891, %v911
      %v928 = vadd.f32 %v892, %v912
      %v929 = vadd.f32 %v893, %v913
      %v930 = vadd.f32 %v894, %v914
      %v931 = vadd.f32 %v895, %v915
      %v932 = vadd.f32 %v896, %v916
      %v933 = vadd.f32 %v897, %v917
      %v934 = vadd.f32 %v898, %v918
      %v935 = vadd.f32 %v899, %v919
      %v936 = vadd.f32 %v900, %v920
      %v937 = vlaneseq
      %v938 = vshrl.u32 %v937, 7
      %v939 = vsub.s32 2, %v938
      %v940 = vrot.slane %v720, %v939
      %v941 = vmul.f32 %v807, %v940
      %v942 = vmul.f32 %v855, %v940
      %v943 = vmul.f32 %v810, %v940
      %v944 = vmul.f32 %v856, %v940
      %v945 = vmul.f32 %v813, %v940
      %v946 = vmul.f32 %v857, %v940
      %v947 = vmul.f32 %v816, %v940
      %v948 = vmul.f32 %v858, %v940
      %v949 = vmul.f32 %v819, %v940
      %v950 = vmul.f32 %v859, %v940
      %v951 = vmul.f32 %v822, %v940
      %v952 = vmul.f32 %v860, %v940
      %v953 = vmul.f32 %v825, %v940
      %v954 = vmul.f32 %v861, %v940
      %v955 = vmul.f32 %v828, %v940
      %v956 = vmul.f32 %v862, %v940
      %v957 = vadd.f32 %v921, %v941
      %v958 = vadd.f32 %v922, %v942
      %v959 = vadd.f32 %v923, %v943
      %v960 = vadd.f32 %v924, %v944
      %v961 = vadd.f32 %v925, %v945
      %v962 = vadd.f32 %v926, %v946
      %v963 = vadd.f32 %v927, %v947
      %v964 = vadd.f32 %v928, %v948
      %v965 = vadd.f32 %v929, %v949
      %v966 = vadd.f32 %v930, %v950
      %v967 = vadd.f32 %v931, %v951
      %v968 = vadd.f32 %v932, %v952
      %v969 = vadd.f32 %v933, %v953
      %v970 = vadd.f32 %v934, %v954
      %v971 = vadd.f32 %v935, %v955
      %v972 = vadd.f32 %v936, %v956
      %v973 = vlaneseq
      %v974 = vshrl.u32 %v973, 7
      %v975 = vsub.s32 3, %v974
      %v976 = vrot.slane %v720, %v975
      %v977 = vmul.f32 %v795, %v976
      %v978 = vmul.f32 %v749, %v976
      %v979 = vmul.f32 %v796, %v976
      %v980 = vmul.f32 %v752, %v976
      %v981 = vmul.f32 %v797, %v976
      %v982 = vmul.f32 %v755, %v976
      %v983 = vmul.f32 %v798, %v976
      %v984 = vmul.f32 %v758, %v976
      %v985 = vmul.f32 %v799, %v976
      %v986 = vmul.f32 %v761, %v976
      %v987 = vmul.f32 %v800, %v976
      %v988 = vmul.f32 %v764, %v976
      %v989 = vmul.f32 %v801, %v976
      %v990 = vmul.f32 %v767, %v976
      %v991 = vmul.f32 %v802, %v976
      %v992 = vmul.f32 %v770, %v976
      %v993 = vadd.f32 %v957, %v977
      %v994 = vadd.f32 %v958, %v978
      %v995 = vadd.f32 %v959, %v979
      %v996 = vadd.f32 %v960, %v980
      %v997 = vadd.f32 %v961, %v981
      %v998 = vadd.f32 %v962, %v982
      %v999 = vadd.f32 %v963, %v983
      %v1000 = vadd.f32 %v964, %v984
      %v1001 = vadd.f32 %v965, %v985
      %v1002 = vadd.f32 %v966, %v986
      %v1003 = vadd.f32 %v967, %v987
      %v1004 = vadd.f32 %v968, %v988
      %v1005 = vadd.f32 %v969, %v989
      %v1006 = vadd.f32 %v970, %v990
      %v1007 = vadd.f32 %v971, %v991
      %v1008 = vadd.f32 %v972, %v992
      %v1009 = vlaneseq
      %v1010 = vshrl.u32 %v1009, 7
      %v1011 = vsub.s32 4, %v1010
      %v1012 = vrot.slane %v720, %v1011
      %v1013 = vmul.f32 %v690, %v1012
      %v1014 = vmul.f32 %v691, %v1012
      %v1015 = vmul.f32 %v692, %v1012
      %v1016 = vmul.f32 %v693, %v1012
      %v1017 = vmul.f32 %v694, %v1012
      %v1018 = vmul.f32 %v695, %v1012
      %v1019 = vmul.f32 %v696, %v1012
      %v1020 = vmul.f32 %v697, %v1012
      %v1021 = vmul.f32 %v698, %v1012
      %v1022 = vmul.f32 %v699, %v1012
      %v1023 = vmul.f32 %v700, %v1012
      %v1024 = vmul.f32 %v701, %v1012
      %v1025 = vmul.f32 %v702, %v1012
      %v1026 = vmul.f32 %v703, %v1012
      %v1027 = vmul.f32 %v704, %v1012
      %v1028 = vmul.f32 %v705, %v1012
      %v1029 = vadd.f32 %v993, %v1013
      %v1030 = vadd.f32 %v994, %v1014
      %v1031 = vadd.f32 %v995, %v1015
      %v1032 = vadd.f32 %v996, %v1016
      %v1033 = vadd.f32 %v997, %v1017
      %v1034 = vadd.f32 %v998, %v1018
      %v1035 = vadd.f32 %v999, %v1019
      %v1036 = vadd.f32 %v1000, %v1020
      %v1037 = vadd.f32 %v1001, %v1021
      %v1038 = vadd.f32 %v1002, %v1022
      %v1039 = vadd.f32 %v1003, %v1023
      %v1040 = vadd.f32 %v1004, %v1024
      %v1041 = vadd.f32 %v1005, %v1025
      %v1042 = vadd.f32 %v1006, %v1026
      %v1043 = vadd.f32 %v1007, %v1027
      %v1044 = vadd.f32 %v1008, %v1028
      %v1045 = vlaneseq
      %v1046 = vshrl.u32 %v1045, 7
      %v1047 = vsub.s32 5, %v1046
      %v1048 = vrot.slane %v720, %v1047
      %v1049 = vmul.f32 %v810, %v1048
      %v1050 = vmul.f32 %v856, %v1048
      %v1051 = vmul.f32 %v813, %v1048
      %v1052 = vmul.f32 %v857, %v1048
      %v1053 = vmul.f32 %v816, %v1048
      %v1054 = vmul.f32 %v858, %v1048
      %v1055 = vmul.f32 %v819, %v1048
      %v1056 = vmul.f32 %v859, %v1048
      %v1057 = vmul.f32 %v822, %v1048
      %v1058 = vmul.f32 %v860, %v1048
      %v1059 = vmul.f32 %v825, %v1048
      %v1060 = vmul.f32 %v861, %v1048
      %v1061 = vmul.f32 %v828, %v1048
      %v1062 = vmul.f32 %v862, %v1048
      %v1063 = vmul.f32 %v831, %v1048
      %v1064 = vmul.f32 %v863, %v1048
      %v1065 = vadd.f32 %v1029, %v1049
      %v1066 = vadd.f32 %v1030, %v1050
      %v1067 = vadd.f32 %v1031, %v1051
      %v1068 = vadd.f32 %v1032, %v1052
      %v1069 = vadd.f32 %v1033, %v1053
      %v1070 = vadd.f32 %v1034, %v1054
      %v1071 = vadd.f32 %v1035, %v1055
      %v1072 = vadd.f32 %v1036, %v1056
      %v1073 = vadd.f32 %v1037, %v1057
      %v1074 = vadd.f32 %v1038, %v1058
      %v1075 = vadd.f32 %v1039, %v1059
      %v1076 = vadd.f32 %v1040, %v1060
      %v1077 = vadd.f32 %v1041, %v1061
      %v1078 = vadd.f32 %v1042, %v1062
      %v1079 = vadd.f32 %v1043, %v1063
      %v1080 = vadd.f32 %v1044, %v1064
      %v1081 = vlaneseq
      %v1082 = vshrl.u32 %v1081, 7
      %v1083 = vsub.s32 6, %v1082
      %v1084 = vrot.slane %v720, %v1083
      %v1085 = vmul.f32 %v796, %v1084
      %v1086 = vmul.f32 %v752, %v1084
      %v1087 = vmul.f32 %v797, %v1084
      %v1088 = vmul.f32 %v755, %v1084
      %v1089 = vmul.f32 %v798, %v1084
      %v1090 = vmul.f32 %v758, %v1084
      %v1091 = vmul.f32 %v799, %v1084
      %v1092 = vmul.f32 %v761, %v1084
      %v1093 = vmul.f32 %v800, %v1084
      %v1094 = vmul.f32 %v764, %v1084
      %v1095 = vmul.f32 %v801, %v1084
      %v1096 = vmul.f32 %v767, %v1084
      %v1097 = vmul.f32 %v802, %v1084
      %v1098 = vmul.f32 %v770, %v1084
      %v1099 = vmul.f32 %v803, %v1084
      %v1100 = vmul.f32 %v773, %v1084
      %v1101 = vadd.f32 %v1065, %v1085
      %v1102 = vadd.f32 %v1066, %v1086
      %v1103 = vadd.f32 %v1067, %v1087
      %v1104 = vadd.f32 %v1068, %v1088
      %v1105 = vadd.f32 %v1069, %v1089
      %v1106 = vadd.f32 %v1070, %v1090
      %v1107 = vadd.f32 %v1071, %v1091
      %v1108 = vadd.f32 %v1072, %v1092
      %v1109 = vadd.f32 %v1073, %v1093
      %v1110 = vadd.f32 %v1074, %v1094
      %v1111 = vadd.f32 %v1075, %v1095
      %v1112 = vadd.f32 %v1076, %v1096
      %v1113 = vadd.f32 %v1077, %v1097
      %v1114 = vadd.f32 %v1078, %v1098
      %v1115 = vadd.f32 %v1079, %v1099
      %v1116 = vadd.f32 %v1080, %v1100
      %v1117 = vlaneseq
      %v1118 = vshrl.u32 %v1117, 7
      %v1119 = vsub.s32 7, %v1118
      %v1120 = vrot.slane %v720, %v1119
      %v1121 = vmul.f32 %v692, %v1120
      %v1122 = vmul.f32 %v693, %v1120
      %v1123 = vmul.f32 %v694, %v1120
      %v1124 = vmul.f32 %v695, %v1120
      %v1125 = vmul.f32 %v696, %v1120
      %v1126 = vmul.f32 %v697, %v1120
      %v1127 = vmul.f32 %v698, %v1120
      %v1128 = vmul.f32 %v699, %v1120
      %v1129 = vmul.f32 %v700, %v1120
      %v1130 = vmul.f32 %v701, %v1120
      %v1131 = vmul.f32 %v702, %v1120
      %v1132 = vmul.f32 %v703, %v1120
      %v1133 = vmul.f32 %v704, %v1120
      %v1134 = vmul.f32 %v705, %v1120
      %v1135 = vmul.f32 %v718, %v1120
      %v1136 = vmul.f32 %v719, %v1120
      %v1137 = vadd.f32 %v1101, %v1121
      %v1138 = vadd.f32 %v1102, %v1122
      %v1139 = vadd.f32 %v1103, %v1123
      %v1140 = vadd.f32 %v1104, %v1124
      %v1141 = vadd.f32 %v1105, %v1125
      %v1142 = vadd.f32 %v1106, %v1126
      %v1143 = vadd.f32 %v1107, %v1127
      %v1144 = vadd.f32 %v1108, %v1128
      %v1145 = vadd.f32 %v1109, %v1129
      %v1146 = vadd.f32 %v1110, %v1130
      %v1147 = vadd.f32 %v1111, %v1131
      %v1148 = vadd.f32 %v1112, %v1132
      %v1149 = vadd.f32 %v1113, %v1133
      %v1150 = vadd.f32 %v1114, %v1134
      %v1151 = vadd.f32 %v1115, %v1135
      %v1152 = vadd.f32 %v1116, %v1136
      %v1153 = vlaneseq
      %v1154 = vshrl.u32 %v1153, 7
      %v1155 = vsub.s32 0, %v1154
      %v1156 = vrot.slane %v721, %v1155
      %v1157 = vmul.f32 %v813, %v1156
      %v1158 = vmul.f32 %v857, %v1156
      %v1159 = vmul.f32 %v816, %v1156
      %v1160 = vmul.f32 %v858, %v1156
      %v1161 = vmul.f32 %v819, %v1156
      %v1162 = vmul.f32 %v859, %v1156
      %v1163 = vmul.f32 %v822, %v1156
      %v1164 = vmul.f32 %v860, %v1156
      %v1165 = vmul.f32 %v825, %v1156
      %v1166 = vmul.f32 %v861, %v1156
      %v1167 = vmul.f32 %v828, %v1156
      %v1168 = vmul.f32 %v862, %v1156
      %v1169 = vmul.f32 %v831, %v1156
      %v1170 = vmul.f32 %v863, %v1156
      %v1171 = vmul.f32 %v834, %v1156
      %v1172 = vmul.f32 %v864, %v1156
      %v1173 = vadd.f32 %v1137, %v1157
      %v1174 = vadd.f32 %v1138, %v1158
      %v1175 = vadd.f32 %v1139, %v1159
      %v1176 = vadd.f32 %v1140, %v1160
      %v1177 = vadd.f32 %v1141, %v1161
      %v1178 = vadd.f32 %v1142, %v1162
      %v1179 = vadd.f32 %v1143, %v1163
      %v1180 = vadd.f32 %v1144, %v1164
      %v1181 = vadd.f32 %v1145, %v1165
      %v1182 = vadd.f32 %v1146, %v1166
      %v1183 = vadd.f32 %v1147, %v1167
      %v1184 = vadd.f32 %v1148, %v1168
      %v1185 = vadd.f32 %v1149, %v1169
      %v1186 = vadd.f32 %v1150, %v1170
      %v1187 = vadd.f32 %v1151, %v1171
      %v1188 = vadd.f32 %v1152, %v1172
      %v1190 = vlaneseq
      %v1191 = vshrl.u32 %v1190, 7
      %v1192 = vsub.s32 0, %v1191
      %v1193 = vrot.slane %v722, %v1192
      %v1195 = vadd.f32 %v1173, %v1193
      %v1196 = vadd.f32 %v1174, %v1193
      %v1197 = vadd.f32 %v1175, %v1193
      %v1198 = vadd.f32 %v1176, %v1193
      %v1199 = vadd.f32 %v1177, %v1193
      %v1200 = vadd.f32 %v1178, %v1193
      %v1201 = vadd.f32 %v1179, %v1193
      %v1202 = vadd.f32 %v1180, %v1193
      %v1203 = vadd.f32 %v1181, %v1193
      %v1204 = vadd.f32 %v1182, %v1193
      %v1205 = vadd.f32 %v1183, %v1193
      %v1206 = vadd.f32 %v1184, %v1193
      %v1207 = vadd.f32 %v1185, %v1193
      %v1208 = vadd.f32 %v1186, %v1193
      %v1209 = vadd.f32 %v1187, %v1193
      %v1210 = vadd.f32 %v1188, %v1193
      %v1211 = vmax.f32 %v1195, 0.0
      %v1212 = vmax.f32 %v1196, 0.0
      %v1213 = vmax.f32 %v1197, 0.0
      %v1214 = vmax.f32 %v1198, 0.0
      %v1215 = vmax.f32 %v1199, 0.0
      %v1216 = vmax.f32 %v1200, 0.0
      %v1217 = vmax.f32 %v1201, 0.0
      %v1218 = vmax.f32 %v1202, 0.0
      %v1219 = vmax.f32 %v1203, 0.0
      %v1220 = vmax.f32 %v1204, 0.0
      %v1221 = vmax.f32 %v1205, 0.0
      %v1222 = vmax.f32 %v1206, 0.0
      %v1223 = vmax.f32 %v1207, 0.0
      %v1224 = vmax.f32 %v1208, 0.0
      %v1225 = vmax.f32 %v1209, 0.0
      %v1226 = vmax.f32 %v1210, 0.0
      %v1227 = vpack.c.bf16 %v1212, %v1211
      %v1228 = vpack.c.bf16 %v1214, %v1213
      %v1229 = vpack.c.bf16 %v1216, %v1215
      %v1230 = vpack.c.bf16 %v1218, %v1217
      %v1231 = vpack.c.bf16 %v1220, %v1219
      %v1232 = vpack.c.bf16 %v1222, %v1221
      %v1233 = vpack.c.bf16 %v1224, %v1223
      %v1234 = vpack.c.bf16 %v1226, %v1225
      %v1235 = vld [vmem:[%s7] sm:$0xf]
      %v1236 = vld [vmem:[%s8] sm:$0x1]
      %v1238 = vlaneseq
      %v1239 = vshrl.u32 %v1238, 7
      %v1240 = vsub.s32 0, %v1239
      %v1241 = vrot.slane %v1236, %v1240
      %vm1243 = vcmask 64512
      %v1245 = vsel %vm1243, %v1227, 0
      %v1248 = vsel %vm1243, %v1228, 0
      %v1251 = vsel %vm1243, %v1229, 0
      %v1254 = vsel %vm1243, %v1230, 0
      %v1257 = vsel %vm1243, %v1231, 0
      %v1260 = vsel %vm1243, %v1232, 0
      %v1263 = vsel %vm1243, %v1233, 0
      %v1266 = vsel %vm1243, %v1234, 0
      %vm1268 = vcmask 1043456
      %v1270 = vsel %vm1268, %v1235, 0
      %1272 = vmatprep.subr.bf16.mxu0 0
      %1273 = vmatpush1.bf16.msra.mxu0 %v1270
      %1274 = vmatprep.subr.bf16.mxu0 0
      %1275 = vmatpush1.bf16.msra.mxu0 0
      %1276 = vmatprep.subr.bf16.mxu0 0
      %1277 = vmatpush1.bf16.msra.mxu0 0
      %1278 = vmatprep.subr.bf16.mxu0 0
      %1279 = vmatpush1.bf16.msra.mxu0 0
      %1280 = vmatprep.subr.bf16.mxu0 0
      %1281 = vmatpush1.bf16.msra.mxu0 0
      %1282 = vmatprep.subr.bf16.mxu0 0
      %1283 = vmatpush1.bf16.msra.mxu0 0
      %1284 = vmatprep.subr.bf16.mxu0 0
      %1285 = vmatpush1.bf16.msra.mxu0 0
      %1286 = vmatprep.subr.bf16.mxu0 0
      %1287 = vmatpush1.bf16.msra.mxu0 0
      %1288 = vmatprep.subr.bf16.mxu0 0
      %1289 = vmatpush1.bf16.msra.mxu0 0
      %1290 = vmatprep.subr.bf16.mxu0 0
      %1291 = vmatpush1.bf16.msra.mxu0 0
      %1292 = vmatprep.subr.bf16.mxu0 0
      %1293 = vmatpush1.bf16.msra.mxu0 0
      %1294 = vmatprep.subr.bf16.mxu0 0
      %1295 = vmatpush1.bf16.msra.mxu0 0
      %1296 = vmatprep.subr.bf16.mxu0 0
      %1297 = vmatpush1.bf16.msra.mxu0 0
      %1298 = vmatprep.subr.bf16.mxu0 0
      %1299 = vmatpush1.bf16.msra.mxu0 0
      %1300 = vmatprep.subr.bf16.mxu0 0
      %1301 = vmatpush1.bf16.msra.mxu0 0
      %1302 = vmatprep.subr.bf16.mxu0 0
      %1303 = vmatpush1.bf16.msra.mxu0 0
      %1304 = vmatprep.mubr.bf16.mxu0 0
      %1305 = vmatmul.mubr.bf16.gmra.mrb[0].mxu0 %v1245
      %v1306 = vpop.f32.mrb[0].mxu0
      %v1307 = vadd.f32 %v1241, %v1306
      %v1308 = vpop.f32.mrb[0].mxu0
      %v1309 = vpop.f32.mrb[0].mxu0
      %v1310 = vadd.f32 %v1241, %v1309
      %v1311 = vpop.f32.mrb[0].mxu0
      %1312 = vmatprep.mubr.bf16.mxu0 0
      %1313 = vmatmul.mubr.bf16.gmra.mrb[0].mxu0 %v1248
      %v1314 = vpop.f32.mrb[0].mxu0
      %v1315 = vadd.f32 %v1241, %v1314
      %v1316 = vpop.f32.mrb[0].mxu0
      %v1317 = vpop.f32.mrb[0].mxu0
      %v1318 = vadd.f32 %v1241, %v1317
      %v1319 = vpop.f32.mrb[0].mxu0
      %1320 = vmatprep.mubr.bf16.mxu0 0
      %1321 = vmatmul.mubr.bf16.gmra.mrb[0].mxu0 %v1251
      %v1322 = vpop.f32.mrb[0].mxu0
      %v1323 = vadd.f32 %v1241, %v1322
      %v1324 = vpop.f32.mrb[0].mxu0
      %v1325 = vpop.f32.mrb[0].mxu0
      %v1326 = vadd.f32 %v1241, %v1325
      %v1327 = vpop.f32.mrb[0].mxu0
      %1328 = vmatprep.mubr.bf16.mxu0 0
      %1329 = vmatmul.mubr.bf16.gmra.mrb[0].mxu0 %v1254
      %v1330 = vpop.f32.mrb[0].mxu0
      %v1331 = vadd.f32 %v1241, %v1330
      %v1332 = vpop.f32.mrb[0].mxu0
      %v1333 = vpop.f32.mrb[0].mxu0
      %v1334 = vadd.f32 %v1241, %v1333
      %v1335 = vpop.f32.mrb[0].mxu0
      %1336 = vmatprep.mubr.bf16.mxu0 0
      %1337 = vmatmul.mubr.bf16.gmra.mrb[0].mxu0 %v1257
      %v1338 = vpop.f32.mrb[0].mxu0
      %v1339 = vadd.f32 %v1241, %v1338
      %v1340 = vpop.f32.mrb[0].mxu0
      %v1341 = vpop.f32.mrb[0].mxu0
      %v1342 = vadd.f32 %v1241, %v1341
      %v1343 = vpop.f32.mrb[0].mxu0
      %1344 = vmatprep.mubr.bf16.mxu0 0
      %1345 = vmatmul.mubr.bf16.gmra.mrb[0].mxu0 %v1260
      %v1346 = vpop.f32.mrb[0].mxu0
      %v1347 = vadd.f32 %v1241, %v1346
      %v1348 = vpop.f32.mrb[0].mxu0
      %v1349 = vpop.f32.mrb[0].mxu0
      %v1350 = vadd.f32 %v1241, %v1349
      %v1351 = vpop.f32.mrb[0].mxu0
      %1352 = vmatprep.mubr.bf16.mxu0 0
      %1353 = vmatmul.mubr.bf16.gmra.mrb[0].mxu0 %v1263
      %v1354 = vpop.f32.mrb[0].mxu0
      %v1355 = vadd.f32 %v1241, %v1354
      %v1356 = vpop.f32.mrb[0].mxu0
      %v1357 = vpop.f32.mrb[0].mxu0
      %v1358 = vadd.f32 %v1241, %v1357
      %v1359 = vpop.f32.mrb[0].mxu0
      %1360 = vmatprep.mubr.bf16.mxu0 0
      %1361 = vmatmul.mubr.bf16.gmra.mrb[0].mxu0 %v1266
      %v1362 = vpop.f32.mrb[0].mxu0
      %v1363 = vadd.f32 %v1241, %v1362
      %v1364 = vpop.f32.mrb[0].mxu0
      %v1365 = vpop.f32.mrb[0].mxu0
      %v1366 = vadd.f32 %v1241, %v1365
      %v1367 = vpop.f32.mrb[0].mxu0
      %1368 = vdwg.mxu0
      %v1369 = vadd.f32 %v1307, %v502
      %v1370 = vadd.f32 %v1310, %v503
      %v1371 = vadd.f32 %v1315, %v504
      %v1372 = vadd.f32 %v1318, %v505
      %v1373 = vadd.f32 %v1323, %v506
      %v1374 = vadd.f32 %v1326, %v507
      %v1375 = vadd.f32 %v1331, %v508
      %v1376 = vadd.f32 %v1334, %v509
      %v1377 = vadd.f32 %v1339, %v510
      %v1378 = vadd.f32 %v1342, %v511
      %v1379 = vadd.f32 %v1347, %v512
      %v1380 = vadd.f32 %v1350, %v513
      %v1381 = vadd.f32 %v1355, %v514
      %v1382 = vadd.f32 %v1358, %v515
      %v1383 = vadd.f32 %v1363, %v516
      %v1384 = vadd.f32 %v1366, %v517
      %1385 = vst.msk [vmem:[%s499] sm:$0xff] %vm540, %v1369
      %1386 = vst.msk [vmem:[%s499 + $0x8] sm:$0xff] %vm540, %v1370
      %1387 = vst.msk [vmem:[%s499 + $0x10] sm:$0xff] %vm540, %v1371
      %1388 = vst.msk [vmem:[%s499 + $0x18] sm:$0xff] %vm540, %v1372
      %1389 = vst.msk [vmem:[%s499 + $0x20] sm:$0xff] %vm540, %v1373
      %1390 = vst.msk [vmem:[%s499 + $0x28] sm:$0xff] %vm540, %v1374
      %1391 = vst.msk [vmem:[%s499 + $0x30] sm:$0xff] %vm540, %v1375
      %1392 = vst.msk [vmem:[%s499 + $0x38] sm:$0xff] %vm540, %v1376
      %1393 = vst.msk [vmem:[%s499 + $0x40] sm:$0xff] %vm540, %v1377
      %1394 = vst.msk [vmem:[%s499 + $0x48] sm:$0xff] %vm540, %v1378
      %1395 = vst.msk [vmem:[%s499 + $0x50] sm:$0xff] %vm540, %v1379
      %1396 = vst.msk [vmem:[%s499 + $0x58] sm:$0xff] %vm540, %v1380
      %1397 = vst.msk [vmem:[%s499 + $0x60] sm:$0xff] %vm540, %v1381
      %1398 = vst.msk [vmem:[%s499 + $0x68] sm:$0xff] %vm540, %v1382
      %1399 = vst.msk [vmem:[%s499 + $0x70] sm:$0xff] %vm540, %v1383
      %1400 = vst.msk [vmem:[%s499 + $0x78] sm:$0xff] %vm540, %v1384
      %s1401 = smul.u32 8, %s25
      %p1402 = scmp.lt.s32.totalorder %s24, 1
      %s1403 = scalar_select %p1402, %s24, 1
      %p1404 = scmp.lt.s32.totalorder %s1401, 15
      %s1405 = scalar_select %p1404, %s1401, 15
      %s1406 = smul.addr %s1405, 2
      %s1407 = smul.addr %s1403, 32
      %s1408 = sadd.s32 %s1406, %s1407
      %s1409 = smul.addr %s1408, 8
      %s1410 = scalar_lea.vmem %s9, %s1409
      // Predicated region
      $region57: #{tpu_custom_call.1} parent=55 // pred_check
        %p1411 = pneg %p278
      $region58: #{tpu_custom_call.1} parent=55 // pred_check_branch
        %1413 = sbr.rel (%p1411) target = $region60
      $region59: #{tpu_custom_call.1} parent=55 // pred_region
        %s1414 = smul.u32 8, %s25
      $region60: #{tpu_custom_call.1} parent=55 // pred_fallthru
        _
    $region56: #{tpu_custom_call.1} parent=5 // pred_fallthru
      _
    %p1415 = scmp.le.s32.totalorder 2, %s15
    // Predicated region
    $region61: #{tpu_custom_call.1} parent=5 // pred_check
      %p1416 = pneg %p1415
    $region62: #{tpu_custom_call.1} parent=5 // pred_check_branch
      %1418 = sbr.rel (%p1416) target = $region64
    $region63: #{tpu_custom_call.1} parent=5 // pred_region
      %s1419 = ssub.s32 %s15, 2
      // Predicated region
      $region65: #{tpu_custom_call.1} parent=63 // pred_check
        %p1420 = pneg %p284
      $region66: #{tpu_custom_call.1} parent=63 // pred_check_branch
        %1422 = sbr.rel (%p1420) target = $region68
      $region67: #{tpu_custom_call.1} parent=63 // pred_region
        %s1423 = smul.u32 8, %s27
        %p1424 = scmp.lt.s32.totalorder %s26, 1
        %s1425 = scalar_select %p1424, %s26, 1
        %p1426 = scmp.lt.s32.totalorder %s1423, 15
        %s1427 = scalar_select %p1426, %s1423, 15
        %s1428 = smul.addr %s1427, 2
        %s1429 = smul.addr %s1425, 32
        %s1430 = sadd.s32 %s1428, %s1429
        %s1431 = smul.addr %s1430, 8
        %s1432 = scalar_lea.vmem %s9, %s1431
      $region68: #{tpu_custom_call.1} parent=63 // pred_fallthru
        _
    $region64: #{tpu_custom_call.1} parent=5 // pred_fallthru
      _
  $region6: #{tpu_custom_call.1} parent=0 // loop_footer
    %s19 = sadd.s32 1, %s15
  $region7: #{tpu_custom_call.1} parent=0 // loop_footer_branch
    %14 = sbr.rel target = $region3
  $region8: #{tpu_custom_call.1} parent=0 // loop_exit
    _

</llo_original>
